<compile_context>
chip_gen: v5e
topology: v5e:2x2
jax: 0.10.0
libtpu: 0.0.40
codegen_flags: <defaults>
</compile_context>

<pallas_src>
import functools

import jax
import jax.numpy as jnp
from jax.experimental import pallas as pl
from jax.experimental.pallas import tpu as pltpu

LANE = 128


def _round_up(v, m):
    return (v + m - 1) // m * m


def gcn_kernel(x_ref, adj_ref, w1_ref, b1_ref, w2_ref, b2_ref, out_ref,
               s1_ref, h1_ref, s2_ref, *, tm, num_class):
    layer = pl.program_id(0)   # 0: layer-1 aggregation, 1: layer-2 aggregation
    tile = pl.program_id(1)    # node-row tile index

    # ---- layer-1 feature transform (tile-invariant): s1 = x @ W1 ----------
    @pl.when(jnp.logical_and(layer == 0, tile == 0))
    def _():
        s1 = jnp.dot(x_ref[...], w1_ref[...],
                     preferred_element_type=jnp.float32)
        s1_ref[...] = s1.astype(jnp.bfloat16)

    adj_tile = adj_ref[...]    # (tm, N) bf16 row tile of the adjacency

    # ---- pass 0: h1 rows for this tile, kept resident in VMEM scratch -----
    @pl.when(layer == 0)
    def _():
        h = jnp.dot(adj_tile, s1_ref[...],
                    preferred_element_type=jnp.float32)
        h = jnp.maximum(h + b1_ref[...], 0.0)
        row0 = pl.multiple_of(tile * tm, tm)
        h1_ref[pl.ds(row0, tm), :] = h
        # TODO(synk): training-mode dropout (pltpu.prng_random_bits mask) not
        # implemented; module is evaluated with training=False (identity).
        # NOTE: out_ref intentionally not written in pass 0 -- the output
        # block index is constant during pass 0, so nothing is flushed and
        # pass 1 overwrites the buffer before the first writeback.

    # ---- layer-2 feature transform (tile-invariant): s2 = h1 @ W2 ---------
    @pl.when(jnp.logical_and(layer == 1, tile == 0))
    def _():
        s2 = jnp.dot(h1_ref[...], w2_ref[...],
                     preferred_element_type=jnp.float32)
        s2_ref[...] = s2.astype(jnp.bfloat16)

    # ---- pass 1: logits for this tile + masked log_softmax ---------------
    @pl.when(layer == 1)
    def _():
        logits = jnp.dot(adj_tile, s2_ref[...],
                         preferred_element_type=jnp.float32)
        logits = logits + b2_ref[...]
        # Exclude padded class lanes from max / lse.
        lane = jax.lax.broadcasted_iota(jnp.int32, logits.shape, 1)
        logits = jnp.where(lane < num_class, logits, -1e30)
        m = jnp.max(logits, axis=1, keepdims=True)
        z = logits - m
        lse = jnp.log(jnp.sum(jnp.exp(z), axis=1, keepdims=True))
        out_ref[...] = z - lse


def gcn_forward(x, adj, w1, b1, w2, b2, *, tm=128):
    n, feat = x.shape
    nhid = w1.shape[1]
    num_class = w2.shape[1]

    n_pad = _round_up(n, tm)
    nh_pad = _round_up(max(nhid, LANE), LANE)
    c_pad = _round_up(max(num_class, LANE), LANE)

    # Zero-pad: extra nodes have zero adjacency rows/cols (no contribution to
    # real rows); extra hidden/class columns stay zero through W/b padding and
    # are masked out of the log_softmax.
    xp = jnp.pad(x.astype(jnp.float32), ((0, n_pad - n), (0, 0)))
    adjp = jnp.pad(adj.astype(jnp.float32), ((0, n_pad - n), (0, n_pad - n)))
    adj_bf16 = adjp.astype(jnp.bfloat16)          # halve adj HBM traffic
    w1p = jnp.pad(w1.astype(jnp.float32), ((0, 0), (0, nh_pad - nhid)))
    b1p = jnp.pad(b1.reshape(1, -1).astype(jnp.float32),
                  ((0, 0), (0, nh_pad - nhid)))
    w2p = jnp.pad(w2.astype(jnp.float32),
                  ((0, nh_pad - nhid), (0, c_pad - num_class)))
    b2p = jnp.pad(b2.reshape(1, -1).astype(jnp.float32),
                  ((0, 0), (0, c_pad - num_class)))

    num_tiles = n_pad // tm
    grid = (2, num_tiles)      # (layer pass, node-row tile)

    def const0(p, t):
        return (0, 0)

    in_specs = [
        pl.BlockSpec((n_pad, feat), const0),                # x (resident)
        pl.BlockSpec((tm, n_pad), lambda p, t: (t, 0)),     # adj row tile
        pl.BlockSpec((feat, nh_pad), const0),               # W1
        pl.BlockSpec((1, nh_pad), const0),                  # b1
        pl.BlockSpec((nh_pad, c_pad), const0),              # W2
        pl.BlockSpec((1, c_pad), const0),                   # b2
    ]
    # Pass 0: constant block (0, 0) -> no writeback until pass 1 starts.
    # Pass 1: block (t, 0) -> one flush per tile, each block visited once.
    out_spec = pl.BlockSpec((tm, c_pad), lambda p, t: (p * t, 0))

    flops = 2 * (n_pad * feat * nh_pad + n_pad * n_pad * nh_pad
                 + n_pad * nh_pad * c_pad + n_pad * n_pad * c_pad)
    bytes_accessed = (2 * n_pad * n_pad * 2          # adj streamed twice, bf16
                      + n_pad * feat * 4             # x read once
                      + n_pad * c_pad * 4            # out written once
                      + (feat * nh_pad + nh_pad * c_pad + nh_pad + c_pad) * 4)

    kernel = functools.partial(gcn_kernel, tm=tm, num_class=num_class)

    out_padded = pl.pallas_call(
        kernel,
        out_shape=jax.ShapeDtypeStruct((n_pad, c_pad), jnp.float32),
        grid_spec=pltpu.PrefetchScalarGridSpec(
            num_scalar_prefetch=0,
            grid=grid,
            in_specs=in_specs,
            out_specs=out_spec,
            scratch_shapes=[
                pltpu.VMEM((n_pad, nh_pad), jnp.bfloat16),   # s1 = x @ W1
                pltpu.VMEM((n_pad, nh_pad), jnp.float32),    # h1 (full, resident)
                pltpu.VMEM((n_pad, c_pad), jnp.bfloat16),    # s2 = h1 @ W2
            ],
        ),
        compiler_params=pltpu.CompilerParams(
            # Row axis must stay "arbitrary": pass 1 reads the h1 scratch
            # filled by all pass-0 tiles (see TODO above for a megacore split).
            dimension_semantics=("arbitrary", "arbitrary"),
            vmem_limit_bytes=32 * 1024 * 1024,
        ),
        cost_estimate=pl.CostEstimate(
            flops=flops,
            transcendentals=n_pad * c_pad,
            bytes_accessed=bytes_accessed,
        ),
    )(xp, adj_bf16, w1p, b1p, w2p, b2p)

    return out_padded[:n, :num_class]


def gcn_reference(x, adj, w1, b1, w2, b2):
    # Mirrors the kernel's numerics: adjacency and per-layer supports in bf16,
    # f32 accumulation on the MXU.
    adj_q = adj.astype(jnp.bfloat16)
    s1 = jnp.dot(x, w1, precision=jax.lax.Precision.HIGHEST).astype(jnp.bfloat16)
    h1 = jnp.maximum(
        jnp.dot(adj_q, s1, preferred_element_type=jnp.float32)
        + b1.reshape(1, -1), 0.0)
    s2 = jnp.dot(h1, w2, precision=jax.lax.Precision.HIGHEST).astype(jnp.bfloat16)
    logits = (jnp.dot(adj_q, s2, preferred_element_type=jnp.float32)
              + b2.reshape(1, -1))
    return jax.nn.log_softmax(logits, axis=1)


if __name__ == "__main__":
    # Small, deterministic synthetic problem (N multiple of the row tile).
    N, FEAT_DIM, NHID, NUM_CLASS = 256, 64, 16, 8
    TM = 128

    key = jax.random.PRNGKey(0)
    kx, kadj, kw1, kb1, kw2, kb2 = jax.random.split(key, 6)

    x = jax.random.normal(kx, (N, FEAT_DIM), dtype=jnp.float32)

    # Row-normalized adjacency with self-loops (typical GCN input).
    a = (jax.random.uniform(kadj, (N, N)) < 0.05).astype(jnp.float32)
    a = jnp.maximum(a, a.T) + jnp.eye(N, dtype=jnp.float32)
    deg = jnp.sum(a, axis=1, keepdims=True)
    adj = a / deg

    # GraphConvolution init: uniform(-stdv, stdv), stdv = 1/sqrt(out_features).
    stdv1 = 1.0 / jnp.sqrt(jnp.float32(NHID))
    w1 = jax.random.uniform(kw1, (FEAT_DIM, NHID), minval=-stdv1, maxval=stdv1,
                            dtype=jnp.float32)
    b1 = jax.random.uniform(kb1, (NHID,), minval=-stdv1, maxval=stdv1,
                            dtype=jnp.float32)
    stdv2 = 1.0 / jnp.sqrt(jnp.float32(NUM_CLASS))
    w2 = jax.random.uniform(kw2, (NHID, NUM_CLASS), minval=-stdv2, maxval=stdv2,
                            dtype=jnp.float32)
    b2 = jax.random.uniform(kb2, (NUM_CLASS,), minval=-stdv2, maxval=stdv2,
                            dtype=jnp.float32)

    out = gcn_forward(x, adj, w1, b1, w2, b2, tm=TM)
    out = jax.block_until_ready(out)

    ref = gcn_reference(x, adj, w1, b1, w2, b2)
    assert out.shape == (N, NUM_CLASS)
    assert jnp.allclose(out, ref, atol=2e-3, rtol=2e-3), (
        float(jnp.max(jnp.abs(out - ref))))

    print("KERNEL_OK")
</pallas_src>

<mosaic_0001>
module attributes {stable_mosaic.version = 11 : i64} {
  func.func @gcn_kernel(%arg0: i32, %arg1: i32, %arg2: memref<256x64xf32, #tpu.memory_space<vmem>>, %arg3: memref<128x256xbf16, #tpu.memory_space<vmem>>, %arg4: memref<64x128xf32, #tpu.memory_space<vmem>>, %arg5: memref<1x128xf32, #tpu.memory_space<vmem>>, %arg6: memref<128x128xf32, #tpu.memory_space<vmem>>, %arg7: memref<1x128xf32, #tpu.memory_space<vmem>>, %arg8: memref<128x128xf32, #tpu.memory_space<vmem>>, %arg9: memref<256x128xbf16, #tpu.memory_space<vmem>>, %arg10: memref<256x128xf32, #tpu.memory_space<vmem>>, %arg11: memref<256x128xbf16, #tpu.memory_space<vmem>>) attributes {dimension_semantics = [#tpu.dimension_semantics<arbitrary>, #tpu.dimension_semantics<arbitrary>], iteration_bounds = array<i64: 2, 2>, scalar_prefetch = 0 : i64, scratch_operands = 3 : i64, tpu.core_type = #tpu.core_type<tc>, window_params = [{pipeline_mode = #tpu.pipeline_mode<synchronous>, transform_indices = @transform_0, window_bounds = array<i64: 256, 64>}, {transform_indices = @transform_1, window_bounds = array<i64: 128, 256>}, {pipeline_mode = #tpu.pipeline_mode<synchronous>, transform_indices = @transform_2, window_bounds = array<i64: 64, 128>}, {pipeline_mode = #tpu.pipeline_mode<synchronous>, transform_indices = @transform_3, window_bounds = array<i64: 1, 128>}, {pipeline_mode = #tpu.pipeline_mode<synchronous>, transform_indices = @transform_4, window_bounds = array<i64: 128, 128>}, {pipeline_mode = #tpu.pipeline_mode<synchronous>, transform_indices = @transform_5, window_bounds = array<i64: 1, 128>}, {transform_indices = @transform_6, window_bounds = array<i64: 128, 128>}]} {
    %c0_i32 = arith.constant 0 : i32
    %0 = arith.cmpi eq, %arg0, %c0_i32 : i32
    %c0_i32_0 = arith.constant 0 : i32
    %1 = arith.cmpi eq, %arg1, %c0_i32_0 : i32
    %2 = arith.andi %0, %1 : i1
    %3 = arith.extui %2 : i1 to i32
    %c0_i32_1 = arith.constant 0 : i32
    %4 = arith.cmpi ne, %3, %c0_i32_1 : i32
    scf.if %4 {
      %c0_9 = arith.constant 0 : index
      %c0_10 = arith.constant 0 : index
      %17 = vector.load %arg2[%c0_9, %c0_10] : memref<256x64xf32, #tpu.memory_space<vmem>>, vector<256x64xf32>
      %c0_11 = arith.constant 0 : index
      %c0_12 = arith.constant 0 : index
      %18 = vector.load %arg4[%c0_11, %c0_12] : memref<64x128xf32, #tpu.memory_space<vmem>>, vector<64x128xf32>
      %cst = arith.constant dense<0.000000e+00> : vector<256x128xf32>
      %19 = tpu.matmul %17, %18, %cst {dimension_numbers = #tpu.dot_dimension_numbers<[1], [0], [0], [1], [0, 0, 1, 1], [], []>} : vector<256x64xf32>, vector<64x128xf32>, vector<256x128xf32> -> vector<256x128xf32>
      %20 = arith.truncf %19 : vector<256x128xf32> to vector<256x128xbf16>
      %c0_13 = arith.constant 0 : index
      %c0_14 = arith.constant 0 : index
      %21 = vector.load %arg9[%c0_13, %c0_14] : memref<256x128xbf16, #tpu.memory_space<vmem>>, vector<256x128xbf16>
      tpu.vector_store %arg9[%c0_13, %c0_14], %20 {strides = array<i32>} : memref<256x128xbf16, #tpu.memory_space<vmem>>, vector<256x128xbf16>,
    } else {
    }
    %c0 = arith.constant 0 : index
    %c0_2 = arith.constant 0 : index
    %5 = vector.load %arg3[%c0, %c0_2] : memref<128x256xbf16, #tpu.memory_space<vmem>>, vector<128x256xbf16>
    %c0_i32_3 = arith.constant 0 : i32
    %6 = arith.cmpi eq, %arg0, %c0_i32_3 : i32
    %7 = arith.extui %6 : i1 to i32
    %c0_i32_4 = arith.constant 0 : i32
    %8 = arith.cmpi ne, %7, %c0_i32_4 : i32
    scf.if %8 {
      %c0_9 = arith.constant 0 : index
      %c0_10 = arith.constant 0 : index
      %17 = vector.load %arg9[%c0_9, %c0_10] : memref<256x128xbf16, #tpu.memory_space<vmem>>, vector<256x128xbf16>
      %cst = arith.constant dense<0.000000e+00> : vector<128x128xf32>
      %18 = tpu.matmul %5, %17, %cst {dimension_numbers = #tpu.dot_dimension_numbers<[1], [0], [0], [1], [0, 0, 1, 1], [], []>} : vector<128x256xbf16>, vector<256x128xbf16>, vector<128x128xf32> -> vector<128x128xf32>
      %c0_11 = arith.constant 0 : index
      %c0_12 = arith.constant 0 : index
      %19 = vector.load %arg5[%c0_11, %c0_12] : memref<1x128xf32, #tpu.memory_space<vmem>>, vector<1x128xf32>
      %20 = vector.broadcast %19 : vector<1x128xf32> to vector<128x128xf32>
      %21 = arith.addf %18, %20 : vector<128x128xf32>
      %cst_13 = arith.constant 0.000000e+00 : f32
      %22 = vector.broadcast %cst_13 : f32 to vector<128x128xf32>
      %23 = arith.maximumf %21, %22 : vector<128x128xf32>
      %c128_i32 = arith.constant 128 : i32
      %24 = arith.muli %arg1, %c128_i32 : i32
      %25 = tpu.assume_multiple %24, 128 : i32
      %26 = arith.index_cast %25 : i32 to index
      %c0_14 = arith.constant 0 : index
      %27 = vector.load %arg10[%26, %c0_14] : memref<256x128xf32, #tpu.memory_space<vmem>>, vector<128x128xf32>
      tpu.vector_store %arg10[%26, %c0_14], %23 {strides = array<i32>} : memref<256x128xf32, #tpu.memory_space<vmem>>, vector<128x128xf32>,
    } else {
    }
    %c1_i32 = arith.constant 1 : i32
    %9 = arith.cmpi eq, %arg0, %c1_i32 : i32
    %c0_i32_5 = arith.constant 0 : i32
    %10 = arith.cmpi eq, %arg1, %c0_i32_5 : i32
    %11 = arith.andi %9, %10 : i1
    %12 = arith.extui %11 : i1 to i32
    %c0_i32_6 = arith.constant 0 : i32
    %13 = arith.cmpi ne, %12, %c0_i32_6 : i32
    scf.if %13 {
      %c0_9 = arith.constant 0 : index
      %c0_10 = arith.constant 0 : index
      %17 = vector.load %arg10[%c0_9, %c0_10] : memref<256x128xf32, #tpu.memory_space<vmem>>, vector<256x128xf32>
      %c0_11 = arith.constant 0 : index
      %c0_12 = arith.constant 0 : index
      %18 = vector.load %arg6[%c0_11, %c0_12] : memref<128x128xf32, #tpu.memory_space<vmem>>, vector<128x128xf32>
      %cst = arith.constant dense<0.000000e+00> : vector<256x128xf32>
      %19 = tpu.matmul %17, %18, %cst {dimension_numbers = #tpu.dot_dimension_numbers<[1], [0], [0], [1], [0, 0, 1, 1], [], []>} : vector<256x128xf32>, vector<128x128xf32>, vector<256x128xf32> -> vector<256x128xf32>
      %20 = arith.truncf %19 : vector<256x128xf32> to vector<256x128xbf16>
      %c0_13 = arith.constant 0 : index
      %c0_14 = arith.constant 0 : index
      %21 = vector.load %arg11[%c0_13, %c0_14] : memref<256x128xbf16, #tpu.memory_space<vmem>>, vector<256x128xbf16>
      tpu.vector_store %arg11[%c0_13, %c0_14], %20 {strides = array<i32>} : memref<256x128xbf16, #tpu.memory_space<vmem>>, vector<256x128xbf16>,
    } else {
    }
    %c1_i32_7 = arith.constant 1 : i32
    %14 = arith.cmpi eq, %arg0, %c1_i32_7 : i32
    %15 = arith.extui %14 : i1 to i32
    %c0_i32_8 = arith.constant 0 : i32
    %16 = arith.cmpi ne, %15, %c0_i32_8 : i32
    scf.if %16 {
      %c0_9 = arith.constant 0 : index
      %c0_10 = arith.constant 0 : index
      %17 = vector.load %arg11[%c0_9, %c0_10] : memref<256x128xbf16, #tpu.memory_space<vmem>>, vector<256x128xbf16>
      %cst = arith.constant dense<0.000000e+00> : vector<128x128xf32>
      %18 = tpu.matmul %5, %17, %cst {dimension_numbers = #tpu.dot_dimension_numbers<[1], [0], [0], [1], [0, 0, 1, 1], [], []>} : vector<128x256xbf16>, vector<256x128xbf16>, vector<128x128xf32> -> vector<128x128xf32>
      %c0_11 = arith.constant 0 : index
      %c0_12 = arith.constant 0 : index
      %19 = vector.load %arg7[%c0_11, %c0_12] : memref<1x128xf32, #tpu.memory_space<vmem>>, vector<1x128xf32>
      %20 = vector.broadcast %19 : vector<1x128xf32> to vector<128x128xf32>
      %21 = arith.addf %18, %20 : vector<128x128xf32>
      %22 = tpu.iota {dimensions = array<i32: 1>} : vector<128x128xi32>
      %c8_i32 = arith.constant 8 : i32
      %23 = vector.broadcast %c8_i32 : i32 to vector<128x128xi32>
      %24 = arith.cmpi slt, %22, %23 : vector<128x128xi32>
      %cst_13 = arith.constant -1.000000e+30 : f32
      %25 = vector.broadcast %cst_13 : f32 to vector<128x128xf32>
      %26 = arith.select %24, %21, %25 : vector<128x128xi1>, vector<128x128xf32>
      %cst_14 = arith.constant dense<0xFF800000> : vector<128xf32>
      %27 = vector.multi_reduction <maximumf>, %26, %cst_14 [1] : vector<128x128xf32> to vector<128xf32>
      %28 = vector.shape_cast %27 : vector<128xf32> to vector<128x1xf32>
      %29 = vector.broadcast %28 : vector<128x1xf32> to vector<128x128xf32>
      %30 = arith.subf %26, %29 : vector<128x128xf32>
      %31 = math.exp %30 : vector<128x128xf32>
      %cst_15 = arith.constant dense<0.000000e+00> : vector<128xf32>
      %32 = vector.multi_reduction <add>, %31, %cst_15 [1] : vector<128x128xf32> to vector<128xf32>
      %33 = vector.shape_cast %32 : vector<128xf32> to vector<128x1xf32>
      %34 = math.log %33 : vector<128x1xf32>
      %35 = vector.broadcast %34 : vector<128x1xf32> to vector<128x128xf32>
      %36 = arith.subf %30, %35 : vector<128x128xf32>
      %c0_16 = arith.constant 0 : index
      %c0_17 = arith.constant 0 : index
      %37 = vector.load %arg8[%c0_16, %c0_17] : memref<128x128xf32, #tpu.memory_space<vmem>>, vector<128x128xf32>
      tpu.vector_store %arg8[%c0_16, %c0_17], %36 {strides = array<i32>} : memref<128x128xf32, #tpu.memory_space<vmem>>, vector<128x128xf32>,
    } else {
    }
    return
  }
  func.func @transform_0(%arg0: i32, %arg1: i32) -> (i32, i32) {
    %c0_i32 = arith.constant 0 : i32
    %c0_i32_0 = arith.constant 0 : i32
    %c0_i32_1 = arith.constant 0 : i32
    return %c0_i32, %c0_i32_0 : i32, i32
  }
  func.func @transform_1(%arg0: i32, %arg1: i32) -> (i32, i32) {
    %c0_i32 = arith.constant 0 : i32
    %c0_i32_0 = arith.constant 0 : i32
    return %arg1, %c0_i32 : i32, i32
  }
  func.func @transform_2(%arg0: i32, %arg1: i32) -> (i32, i32) {
    %c0_i32 = arith.constant 0 : i32
    %c0_i32_0 = arith.constant 0 : i32
    %c0_i32_1 = arith.constant 0 : i32
    return %c0_i32, %c0_i32_0 : i32, i32
  }
  func.func @transform_3(%arg0: i32, %arg1: i32) -> (i32, i32) {
    %c0_i32 = arith.constant 0 : i32
    %c0_i32_0 = arith.constant 0 : i32
    %c0_i32_1 = arith.constant 0 : i32
    return %c0_i32, %c0_i32_0 : i32, i32
  }
  func.func @transform_4(%arg0: i32, %arg1: i32) -> (i32, i32) {
    %c0_i32 = arith.constant 0 : i32
    %c0_i32_0 = arith.constant 0 : i32
    %c0_i32_1 = arith.constant 0 : i32
    return %c0_i32, %c0_i32_0 : i32, i32
  }
  func.func @transform_5(%arg0: i32, %arg1: i32) -> (i32, i32) {
    %c0_i32 = arith.constant 0 : i32
    %c0_i32_0 = arith.constant 0 : i32
    %c0_i32_1 = arith.constant 0 : i32
    return %c0_i32, %c0_i32_0 : i32, i32
  }
  func.func @transform_6(%arg0: i32, %arg1: i32) -> (i32, i32) {
    %0 = arith.muli %arg0, %arg1 : i32
    %c0_i32 = arith.constant 0 : i32
    %c0_i32_0 = arith.constant 0 : i32
    return %0, %c0_i32 : i32, i32
  }
}

</mosaic_0001>

<llo_original>
// kernel: tpu_custom_call.1
$region0: #{tpu_custom_call.1}
  #allocation0 [shape = 'u32[]', space=smem, size = 0x4, offset = 0x4, fixed_abs, tag = 'smem constant byte address 0x4 - core index']
  #allocation1 [shape = 'u32[72,128]{1,0:T(1,128)}', space=vmem, size = 0x9000, scoped, tag = 'internal scratch']
  #allocation2 [shape = 'bf16[256,128]{1,0:T(8,128)(2,1)}', space=vmem, size = 0x10000, scoped, tag = 'scratch operand']
  #allocation3 [shape = 'f32[256,128]{1,0:T(8,128)}', space=vmem, size = 0x20000, scoped, tag = 'scratch operand']
  #allocation4 [shape = 'bf16[256,128]{1,0:T(8,128)(2,1)}', space=vmem, size = 0x10000, scoped, tag = 'scratch operand']
  %s0 = inlined_call_operand.vmem [shape: f32[256,64], index: 0, kind: input, shape index: {}]
  %s1 = inlined_call_operand.vmem [shape: bf16[256,256], index: 1, kind: input, shape index: {}]
  %s2 = inlined_call_operand.hbm [shape: f32[64,128], index: 2, kind: input, shape index: {}]
  %s3 = inlined_call_operand.hbm [shape: f32[1,128], index: 3, kind: input, shape index: {}]
  %s4 = inlined_call_operand.vmem [shape: f32[128,128], index: 4, kind: input, shape index: {}]
  %s5 = inlined_call_operand.vmem [shape: f32[1,128], index: 5, kind: input, shape index: {}]
  %s6 = inlined_call_operand.hbm [shape: f32[256,128], index: 6, kind: output, shape index: {}]
  %s7 = sld [smem:[#allocation0]]
  $region81: #{tpu_custom_call.1} parent=0
    _
  %s9 = ssub.s32 1, %s7
  %s10 = scalar_select 0, %s9, %s7
  $region1: #{tpu_custom_call.1} parent=0
    #allocation5 [shape = 'u8[32768]{0}', space=vmem, size = 0x8000, scoped, tag = 'input window, operand 2, single buffered']
    #allocation6 [shape = 's32[2]{0}', space=sflag, size = 0x8, scoped, tag = 'scoped memory for tpu_custom_call.1']
    #allocation7 [shape = 's32[2]{0}', space=sflag, size = 0x8, scoped, tag = 'scoped memory for tpu_custom_call.1']
    #allocation8 [shape = 'u8[512]{0}', space=vmem, size = 0x400, scoped, tag = 'input window, operand 3, single buffered']
    #allocation9 [shape = 's32[1]{0}', space=sflag, size = 0x4, scoped, tag = 'scoped memory for tpu_custom_call.1']
    #allocation10 [shape = 'u8[131072]{0}', space=vmem, size = 0x20000, scoped, tag = 'output window, operand 0']
    %11 = vsyncpa [#allocation6], 0
    %12 = vsyncpa [#allocation9], 0
    %13 = vsyncpa [#allocation7], 0
    %s14 = scalar_lea.sflag [#allocation7], 1
    %15 = vsyncpa %s14, 0
    loop: start=0, step=1, limit=6
    $region2: #{tpu_custom_call.1} parent=1 // loop_pre_header
      _
    $region3: #{tpu_custom_call.1} parent=1 // loop_header
      %s17 = sphi 0, %s21
      %p18 = scmp.ge.s32.totalorder %s17, 6
      %s24 = sphi 0, %s36
      %s25 = sphi 0, %s32
      %s26 = sphi 0, %s24
      %s27 = sphi 0, %s25
      %s28 = sphi 0, %s26
      %s29 = sphi 0, %s27
      %s37 = sphi 0, %s37
      %s39 = sphi 0, %s37
      %s40 = sphi 0, %s39
      %s54 = sphi 0, %s40
      %s60 = sphi 0, %s62
      %s63 = sphi 0, %s60
      %s64 = sphi 0, %s63
      %s80 = sphi 0, %s64
      %s84 = sphi 0, %s84
      %s86 = sphi 0, %s84
      %s87 = sphi 0, %s86
      %s101 = sphi 0, %s87
      %s105 = sphi 0, %s105
      %s107 = sphi 0, %s105
      %s108 = sphi 0, %s107
      %s122 = sphi 0, %s108
      %s126 = sphi 0, %s126
      %s128 = sphi 0, %s126
      %s129 = sphi 0, %s128
      %s143 = sphi 0, %s129
      %s147 = sphi 0, %s147
      %s149 = sphi 0, %s147
      %s150 = sphi 0, %s149
      %s164 = sphi 0, %s150
      %s172 = sphi 0, %s174
      %s175 = sphi 0, %s172
      %s176 = sphi 0, %s175
      %s192 = sphi 0, %s176
    $region4: #{tpu_custom_call.1} parent=1 // loop_header_branch
      %20 = sbr.rel (%p18) target = $region8
    $region5: #{tpu_custom_call.1} parent=1 // loop_body
      %s22 = ssub.s32 %s17, 1
      %s23 = ssub.s32 %s17, 2
      %s30 = sadd.s32 1, %s25
      %p31 = scmp.ge.s32.totalorder %s30, 2
      %s32 = scalar_select %p31, 0, %s30
      %s33 = sadd.s32 1, %s24
      %s34 = scalar_select %p31, %s33, %s24
      %p35 = scmp.ge.s32.totalorder %s34, 2
      %s36 = scalar_select %p35, 0, %s34
      %s38 = sadd.s32 %s37, 1
      %p41 = scmp.eq.s32.totalorder %s17, 3
      %p42 = scmp.ne.s32.totalorder %s37, %s39
      %p43 = scmp.eq.s32.totalorder %s17, 0
      %p44 = por %p42, %p43
      %p45 = scmp.ne.s32.totalorder %s37, %s39
      %p46 = scmp.eq.s32.totalorder %s22, 3
      %p47 = por %p45, %p46
      %p48 = scmp.ne.s32.totalorder %s39, %s40
      %p49 = scmp.eq.s32.totalorder %s22, 0
      %p50 = por %p48, %p49
      %p51 = scmp.ne.s32.totalorder %s39, %s40
      %p52 = scmp.eq.s32.totalorder %s23, 3
      %p53 = por %p51, %p52
      %p55 = scmp.ne.s32.totalorder %s40, %s54
      %p56 = scmp.eq.s32.totalorder %s23, 0
      %p57 = por %p55, %p56
      %s58 = ssub.s32 %s25, %s32
      %p59 = scmp.eq.s32.totalorder %s58, 0
      %s61 = sadd.s32 %s60, 1
      %s62 = scalar_select %p59, %s60, %s61
      %p65 = pneg %p59
      %p66 = scmp.eq.s32.totalorder %s17, 3
      %p67 = por %p65, %p66
      %p68 = scmp.ne.s32.totalorder %s60, %s63
      %p69 = scmp.eq.s32.totalorder %s17, 0
      %p70 = por %p68, %p69
      %p71 = scmp.ne.s32.totalorder %s60, %s63
      %p72 = scmp.eq.s32.totalorder %s22, 3
      %p73 = por %p71, %p72
      %p74 = scmp.ne.s32.totalorder %s63, %s64
      %p75 = scmp.eq.s32.totalorder %s22, 0
      %p76 = por %p74, %p75
      %p77 = scmp.ne.s32.totalorder %s63, %s64
      %p78 = scmp.eq.s32.totalorder %s23, 3
      %p79 = por %p77, %p78
      %p81 = scmp.ne.s32.totalorder %s64, %s80
      %p82 = scmp.eq.s32.totalorder %s23, 0
      %p83 = por %p81, %p82
      %s85 = sadd.s32 %s84, 1
      %p88 = scmp.eq.s32.totalorder %s17, 3
      %p89 = scmp.ne.s32.totalorder %s84, %s86
      %p90 = scmp.eq.s32.totalorder %s17, 0
      %p91 = por %p89, %p90
      %p92 = scmp.ne.s32.totalorder %s84, %s86
      %p93 = scmp.eq.s32.totalorder %s22, 3
      %p94 = por %p92, %p93
      %p95 = scmp.ne.s32.totalorder %s86, %s87
      %p96 = scmp.eq.s32.totalorder %s22, 0
      %p97 = por %p95, %p96
      %p98 = scmp.ne.s32.totalorder %s86, %s87
      %p99 = scmp.eq.s32.totalorder %s23, 3
      %p100 = por %p98, %p99
      %p102 = scmp.ne.s32.totalorder %s87, %s101
      %p103 = scmp.eq.s32.totalorder %s23, 0
      %p104 = por %p102, %p103
      %s106 = sadd.s32 %s105, 1
      %p109 = scmp.eq.s32.totalorder %s17, 3
      %p110 = scmp.ne.s32.totalorder %s105, %s107
      %p111 = scmp.eq.s32.totalorder %s17, 0
      %p112 = por %p110, %p111
      %p113 = scmp.ne.s32.totalorder %s105, %s107
      %p114 = scmp.eq.s32.totalorder %s22, 3
      %p115 = por %p113, %p114
      %p116 = scmp.ne.s32.totalorder %s107, %s108
      %p117 = scmp.eq.s32.totalorder %s22, 0
      %p118 = por %p116, %p117
      %p119 = scmp.ne.s32.totalorder %s107, %s108
      %p120 = scmp.eq.s32.totalorder %s23, 3
      %p121 = por %p119, %p120
      %p123 = scmp.ne.s32.totalorder %s108, %s122
      %p124 = scmp.eq.s32.totalorder %s23, 0
      %p125 = por %p123, %p124
      %s127 = sadd.s32 %s126, 1
      %p130 = scmp.eq.s32.totalorder %s17, 3
      %p131 = scmp.ne.s32.totalorder %s126, %s128
      %p132 = scmp.eq.s32.totalorder %s17, 0
      %p133 = por %p131, %p132
      %p134 = scmp.ne.s32.totalorder %s126, %s128
      %p135 = scmp.eq.s32.totalorder %s22, 3
      %p136 = por %p134, %p135
      %p137 = scmp.ne.s32.totalorder %s128, %s129
      %p138 = scmp.eq.s32.totalorder %s22, 0
      %p139 = por %p137, %p138
      %p140 = scmp.ne.s32.totalorder %s128, %s129
      %p141 = scmp.eq.s32.totalorder %s23, 3
      %p142 = por %p140, %p141
      %p144 = scmp.ne.s32.totalorder %s129, %s143
      %p145 = scmp.eq.s32.totalorder %s23, 0
      %p146 = por %p144, %p145
      %s148 = sadd.s32 %s147, 1
      %p151 = scmp.eq.s32.totalorder %s17, 3
      %p152 = scmp.ne.s32.totalorder %s147, %s149
      %p153 = scmp.eq.s32.totalorder %s17, 0
      %p154 = por %p152, %p153
      %p155 = scmp.ne.s32.totalorder %s147, %s149
      %p156 = scmp.eq.s32.totalorder %s22, 3
      %p157 = por %p155, %p156
      %p158 = scmp.ne.s32.totalorder %s149, %s150
      %p159 = scmp.eq.s32.totalorder %s22, 0
      %p160 = por %p158, %p159
      %p161 = scmp.ne.s32.totalorder %s149, %s150
      %p162 = scmp.eq.s32.totalorder %s23, 3
      %p163 = por %p161, %p162
      %p165 = scmp.ne.s32.totalorder %s150, %s164
      %p166 = scmp.eq.s32.totalorder %s23, 0
      %p167 = por %p165, %p166
      %s168 = smul.u32 %s24, %s25
      %s169 = smul.u32 %s36, %s32
      %s170 = ssub.s32 %s168, %s169
      %p171 = scmp.eq.s32.totalorder %s170, 0
      %s173 = sadd.s32 %s172, 1
      %s174 = scalar_select %p171, %s172, %s173
      %p177 = pneg %p171
      %p178 = scmp.eq.s32.totalorder %s17, 3
      %p179 = por %p177, %p178
      %p180 = scmp.ne.s32.totalorder %s172, %s175
      %p181 = scmp.eq.s32.totalorder %s17, 0
      %p182 = por %p180, %p181
      %p183 = scmp.ne.s32.totalorder %s172, %s175
      %p184 = scmp.eq.s32.totalorder %s22, 3
      %p185 = por %p183, %p184
      %p186 = scmp.ne.s32.totalorder %s175, %s176
      %p187 = scmp.eq.s32.totalorder %s22, 0
      %p188 = por %p186, %p187
      %p189 = scmp.ne.s32.totalorder %s175, %s176
      %p190 = scmp.eq.s32.totalorder %s23, 3
      %p191 = por %p189, %p190
      %p193 = scmp.ne.s32.totalorder %s176, %s192
      %p194 = scmp.eq.s32.totalorder %s23, 0
      %p195 = por %p193, %p194
      %p196 = scmp.le.s32.totalorder 1, %s17
      %p197 = scmp.lt.s32.totalorder %s17, 5
      %p198 = pnand %p196, %p197
      %p199 = pneg %p198
      // Predicated region
      $region9: #{tpu_custom_call.1} parent=5 // pred_check
        _
      $region10: #{tpu_custom_call.1} parent=5 // pred_check_branch
        %201 = sbr.rel (%p198) target = $region12
      $region11: #{tpu_custom_call.1} parent=5 // pred_region
        %s202 = ssub.s32 %s17, 1
        // Predicated region
        $region13: #{tpu_custom_call.1} parent=11 // pred_check
          %p203 = pneg %p50
        $region14: #{tpu_custom_call.1} parent=11 // pred_check_branch
          %205 = sbr.rel (%p203) target = $region16
        $region15: #{tpu_custom_call.1} parent=11 // pred_region
          _
        $region16: #{tpu_custom_call.1} parent=11 // pred_fallthru
          _
        // Predicated region
        $region17: #{tpu_custom_call.1} parent=11 // pred_check
          %p206 = pneg %p97
        $region18: #{tpu_custom_call.1} parent=11 // pred_check_branch
          %208 = sbr.rel (%p206) target = $region20
        $region19: #{tpu_custom_call.1} parent=11 // pred_region
          %210 = vsyncadd [#allocation6], 0
          %s211 = sshll.u32 %s2, 4
          %s212 = int_to_ptr.hbm [resolvable:$true] %s211
          %s213 = sshll.u32 [#allocation5], 4
          %s214 = int_to_ptr.vmem [resolvable:$true] %s213
          %219 = dma.hbm_to_vmem [thread:$0]  %s212, 1024, %s214, [#allocation6], 128, 128, 8
        $region20: #{tpu_custom_call.1} parent=11 // pred_fallthru
          _
        // Predicated region
        $region21: #{tpu_custom_call.1} parent=11 // pred_check
          %p220 = pneg %p118
        $region22: #{tpu_custom_call.1} parent=11 // pred_check_branch
          %222 = sbr.rel (%p220) target = $region24
        $region23: #{tpu_custom_call.1} parent=11 // pred_region
          %224 = vsyncadd [#allocation9], 0
          %s226 = sshll.u32 %s3, 4
          %s227 = int_to_ptr.hbm [resolvable:$true] %s226
          %s228 = sshll.u32 [#allocation8], 4
          %s229 = int_to_ptr.vmem [resolvable:$true] %s228
          %231 = dma.hbm_to_vmem [thread:$0]  %s227, 16, %s229, [#allocation9]
        $region24: #{tpu_custom_call.1} parent=11 // pred_fallthru
          _
        // Predicated region
        $region25: #{tpu_custom_call.1} parent=11 // pred_check
          %p232 = pneg %p139
        $region26: #{tpu_custom_call.1} parent=11 // pred_check_branch
          %234 = sbr.rel (%p232) target = $region28
        $region27: #{tpu_custom_call.1} parent=11 // pred_region
          _
        $region28: #{tpu_custom_call.1} parent=11 // pred_fallthru
          _
        // Predicated region
        $region29: #{tpu_custom_call.1} parent=11 // pred_check
          %p235 = pneg %p160
        $region30: #{tpu_custom_call.1} parent=11 // pred_check_branch
          %237 = sbr.rel (%p235) target = $region32
        $region31: #{tpu_custom_call.1} parent=11 // pred_region
          _
        $region32: #{tpu_custom_call.1} parent=11 // pred_fallthru
          _
      $region12: #{tpu_custom_call.1} parent=5 // pred_fallthru
        _
      %p238 = scmp.lt.s32.totalorder %s17, 4
      // Predicated region
      $region33: #{tpu_custom_call.1} parent=5 // pred_check
        %p239 = pneg %p238
      $region34: #{tpu_custom_call.1} parent=5 // pred_check_branch
        %241 = sbr.rel (%p239) target = $region36
      $region35: #{tpu_custom_call.1} parent=5 // pred_region
        // Predicated region
        $region37: #{tpu_custom_call.1} parent=35 // pred_check
          %p242 = pneg %p70
        $region38: #{tpu_custom_call.1} parent=35 // pred_check_branch
          %244 = sbr.rel (%p242) target = $region40
        $region39: #{tpu_custom_call.1} parent=35 // pred_region
          %s245 = smul.u32 16, %s25
          %p246 = scmp.lt.s32.totalorder %s245, 31
          %s247 = scalar_select %p246, %s245, 31
          %s248 = smul.addr %s247, 2
          %s249 = smul.addr %s248, 4
          %s250 = scalar_lea.vmem %s1, %s249
          %s251 = smul.u32 16, %s25
        $region40: #{tpu_custom_call.1} parent=35 // pred_fallthru
          _
      $region36: #{tpu_custom_call.1} parent=5 // pred_fallthru
        _
      %p252 = scmp.le.s32.totalorder 1, %s17
      %p253 = scmp.lt.s32.totalorder %s17, 5
      %p254 = pnand %p252, %p253
      %p255 = pneg %p254
      // Predicated region
      $region41: #{tpu_custom_call.1} parent=5 // pred_check
        _
      $region42: #{tpu_custom_call.1} parent=5 // pred_check_branch
        %257 = sbr.rel (%p254) target = $region44
      $region43: #{tpu_custom_call.1} parent=5 // pred_region
        %s258 = ssub.s32 %s17, 1
        // Predicated region
        $region45: #{tpu_custom_call.1} parent=43 // pred_check
          %p259 = pneg %p97
        $region46: #{tpu_custom_call.1} parent=43 // pred_check_branch
          %261 = sbr.rel (%p259) target = $region48
        $region47: #{tpu_custom_call.1} parent=43 // pred_region
          %263 = dma.done [#allocation6], 1024
        $region48: #{tpu_custom_call.1} parent=43 // pred_fallthru
          _
        // Predicated region
        $region49: #{tpu_custom_call.1} parent=43 // pred_check
          %p264 = pneg %p118
        $region50: #{tpu_custom_call.1} parent=43 // pred_check_branch
          %266 = sbr.rel (%p264) target = $region52
        $region51: #{tpu_custom_call.1} parent=43 // pred_region
          %268 = dma.done [#allocation9], 16
        $region52: #{tpu_custom_call.1} parent=43 // pred_fallthru
          _
        %p269 = pneg %p50
        %p270 = pneg %p47
        %s271 = smul.u32 16, %s27
        %p272 = scmp.lt.s32.totalorder %s271, 31
        %s273 = scalar_select %p272, %s271, 31
        %s274 = smul.addr %s273, 2
        %s275 = smul.addr %s274, 4
        %s276 = scalar_lea.vmem %s1, %s275
        %p277 = pneg %p76
        %p278 = pneg %p73
        %p279 = pneg %p97
        %p280 = pneg %p94
        %p281 = pneg %p118
        %p282 = pneg %p115
        %p283 = pneg %p139
        %p284 = pneg %p136
        %p285 = pneg %p160
        %p286 = pneg %p157
        %p287 = pneg %p188
        %p288 = pneg %p185
        %s289 = sand.u32 %s175, 1
        %s290 = scalar_lea.sflag [#allocation7], %s289
        %s291 = sand.u32 %s175, 1
        %s292 = smul.addr %s291, 128
        %s293 = scalar_lea.vmem [#allocation10], %s292
        %s294 = smul.u32 16, %s27
        %p295 = scmp.lt.s32.totalorder %s294, 31
        %s296 = scalar_select %p295, %s294, 31
        %s297 = smul.addr %s296, 2
        %s298 = smul.addr %s297, 4
        %s299 = scalar_lea.vmem %s1, %s298
        %s300 = smul.u32 16, %s27
        %s301 = smul.u32 %s26, %s27
        %s302 = smul.u32 16, %s301
        %p303 = scmp.eq.s32.totalorder %s26, 0
        %p304 = scmp.eq.s32.totalorder %s27, 0
        %p305 = pnand %p303, %p304
        %p306 = pneg %p305
        // Predicated region
        $region53: #{tpu_custom_call.1} parent=43 // pred_check
          _
        $region54: #{tpu_custom_call.1} parent=43 // pred_check_branch
          %308 = sbr.rel (%p305) target = $region56
        $region55: #{tpu_custom_call.1} parent=43 // pred_region
          %v309 = vld [vmem:[%s0] sm:$0xff]
          %v310 = vld [vmem:[%s0 + $0x8] sm:$0xff]
          %v311 = vld [vmem:[%s0 + $0x10] sm:$0xff]
          %v312 = vld [vmem:[%s0 + $0x18] sm:$0xff]
          %v313 = vld [vmem:[%s0 + $0x20] sm:$0xff]
          %v314 = vld [vmem:[%s0 + $0x28] sm:$0xff]
          %v315 = vld [vmem:[%s0 + $0x30] sm:$0xff]
          %v316 = vld [vmem:[%s0 + $0x38] sm:$0xff]
          %v317 = vld [vmem:[%s0 + $0x40] sm:$0xff]
          %v318 = vld [vmem:[%s0 + $0x48] sm:$0xff]
          %v319 = vld [vmem:[%s0 + $0x50] sm:$0xff]
          %v320 = vld [vmem:[%s0 + $0x58] sm:$0xff]
          %v321 = vld [vmem:[%s0 + $0x60] sm:$0xff]
          %v322 = vld [vmem:[%s0 + $0x68] sm:$0xff]
          %v323 = vld [vmem:[%s0 + $0x70] sm:$0xff]
          %v324 = vld [vmem:[%s0 + $0x78] sm:$0xff]
          %v325 = vld [vmem:[%s0 + $0x80] sm:$0xff]
          %v326 = vld [vmem:[%s0 + $0x88] sm:$0xff]
          %v327 = vld [vmem:[%s0 + $0x90] sm:$0xff]
          %v328 = vld [vmem:[%s0 + $0x98] sm:$0xff]
          %v329 = vld [vmem:[%s0 + $0xa0] sm:$0xff]
          %v330 = vld [vmem:[%s0 + $0xa8] sm:$0xff]
          %v331 = vld [vmem:[%s0 + $0xb0] sm:$0xff]
          %v332 = vld [vmem:[%s0 + $0xb8] sm:$0xff]
          %v333 = vld [vmem:[%s0 + $0xc0] sm:$0xff]
          %v334 = vld [vmem:[%s0 + $0xc8] sm:$0xff]
          %v335 = vld [vmem:[%s0 + $0xd0] sm:$0xff]
          %v336 = vld [vmem:[%s0 + $0xd8] sm:$0xff]
          %v337 = vld [vmem:[%s0 + $0xe0] sm:$0xff]
          %v338 = vld [vmem:[%s0 + $0xe8] sm:$0xff]
          %v339 = vld [vmem:[%s0 + $0xf0] sm:$0xff]
          %v340 = vld [vmem:[%s0 + $0xf8] sm:$0xff]
          %v341 = vld [vmem:[#allocation5] sm:$0xff]
          %v342 = vld [vmem:[#allocation5 + $0x8] sm:$0xff]
          %v343 = vld [vmem:[#allocation5 + $0x10] sm:$0xff]
          %v344 = vld [vmem:[#allocation5 + $0x18] sm:$0xff]
          %v345 = vld [vmem:[#allocation5 + $0x20] sm:$0xff]
          %v346 = vld [vmem:[#allocation5 + $0x28] sm:$0xff]
          %v347 = vld [vmem:[#allocation5 + $0x30] sm:$0xff]
          %v348 = vld [vmem:[#allocation5 + $0x38] sm:$0xff]
          %vm349 = vcmask 523264
          %v351 = vsel %vm349, %v309, 0
          %v354 = vsel %vm349, %v310, 0
          %v357 = vsel %vm349, %v311, 0
          %v360 = vsel %vm349, %v312, 0
          %v363 = vsel %vm349, %v313, 0
          %v366 = vsel %vm349, %v314, 0
          %v369 = vsel %vm349, %v315, 0
          %v372 = vsel %vm349, %v316, 0
          %v375 = vsel %vm349, %v317, 0
          %v378 = vsel %vm349, %v318, 0
          %v381 = vsel %vm349, %v319, 0
          %v384 = vsel %vm349, %v320, 0
          %v387 = vsel %vm349, %v321, 0
          %v390 = vsel %vm349, %v322, 0
          %v393 = vsel %vm349, %v323, 0
          %v396 = vsel %vm349, %v324, 0
          %v399 = vsel %vm349, %v325, 0
          %v402 = vsel %vm349, %v326, 0
          %v405 = vsel %vm349, %v327, 0
          %v408 = vsel %vm349, %v328, 0
          %v411 = vsel %vm349, %v329, 0
          %v414 = vsel %vm349, %v330, 0
          %v417 = vsel %vm349, %v331, 0
          %v420 = vsel %vm349, %v332, 0
          %v423 = vsel %vm349, %v333, 0
          %v426 = vsel %vm349, %v334, 0
          %v429 = vsel %vm349, %v335, 0
          %v432 = vsel %vm349, %v336, 0
          %v435 = vsel %vm349, %v337, 0
          %v438 = vsel %vm349, %v338, 0
          %v441 = vsel %vm349, %v339, 0
          %v444 = vsel %vm349, %v340, 0
          %446 = vmatpush.msra.mxu0 0.0
          %447 = vmatpush.msra.mxu0 0.0
          %448 = vmatpush.msra.mxu0 0.0
          %449 = vmatpush.msra.mxu0 0.0
          %450 = vmatpush.msra.mxu0 0.0
          %451 = vmatpush.msra.mxu0 0.0
          %452 = vmatpush.msra.mxu0 0.0
          %453 = vmatpush.msra.mxu0 0.0
          %454 = vmatpush.msra.mxu0 %v348
          %455 = vmatpush.msra.mxu0 %v347
          %456 = vmatpush.msra.mxu0 %v346
          %457 = vmatpush.msra.mxu0 %v345
          %458 = vmatpush.msra.mxu0 %v344
          %459 = vmatpush.msra.mxu0 %v343
          %460 = vmatpush.msra.mxu0 %v342
          %461 = vmatpush.msra.mxu0 %v341
          %462 = vmatmul.f32.gmra.mxu0 %v351
          %v463 = vpop.f32.mrf.mxu0
          %v464 = vadd.f32 0.0, %v463
          %465 = vmatmul.f32.gmra.mxu0 %v354
          %v466 = vpop.f32.mrf.mxu0
          %v467 = vadd.f32 0.0, %v466
          %468 = vmatmul.f32.gmra.mxu0 %v357
          %v469 = vpop.f32.mrf.mxu0
          %v470 = vadd.f32 0.0, %v469
          %471 = vmatmul.f32.gmra.mxu0 %v360
          %v472 = vpop.f32.mrf.mxu0
          %v473 = vadd.f32 0.0, %v472
          %474 = vmatmul.f32.gmra.mxu0 %v363
          %v475 = vpop.f32.mrf.mxu0
          %v476 = vadd.f32 0.0, %v475
          %477 = vmatmul.f32.gmra.mxu0 %v366
          %v478 = vpop.f32.mrf.mxu0
          %v479 = vadd.f32 0.0, %v478
          %480 = vmatmul.f32.gmra.mxu0 %v369
          %v481 = vpop.f32.mrf.mxu0
          %v482 = vadd.f32 0.0, %v481
          %483 = vmatmul.f32.gmra.mxu0 %v372
          %v484 = vpop.f32.mrf.mxu0
          %v485 = vadd.f32 0.0, %v484
          %486 = vmatmul.f32.gmra.mxu0 %v375
          %v487 = vpop.f32.mrf.mxu0
          %v488 = vadd.f32 0.0, %v487
          %489 = vmatmul.f32.gmra.mxu0 %v378
          %v490 = vpop.f32.mrf.mxu0
          %v491 = vadd.f32 0.0, %v490
          %492 = vmatmul.f32.gmra.mxu0 %v381
          %v493 = vpop.f32.mrf.mxu0
          %v494 = vadd.f32 0.0, %v493
          %495 = vmatmul.f32.gmra.mxu0 %v384
          %v496 = vpop.f32.mrf.mxu0
          %v497 = vadd.f32 0.0, %v496
          %498 = vmatmul.f32.gmra.mxu0 %v387
          %v499 = vpop.f32.mrf.mxu0
          %v500 = vadd.f32 0.0, %v499
          %501 = vmatmul.f32.gmra.mxu0 %v390
          %v502 = vpop.f32.mrf.mxu0
          %v503 = vadd.f32 0.0, %v502
          %504 = vmatmul.f32.gmra.mxu0 %v393
          %v505 = vpop.f32.mrf.mxu0
          %v506 = vadd.f32 0.0, %v505
          %507 = vmatmul.f32.gmra.mxu0 %v396
          %v508 = vpop.f32.mrf.mxu0
          %v509 = vadd.f32 0.0, %v508
          %510 = vmatmul.f32.gmra.mxu0 %v399
          %v511 = vpop.f32.mrf.mxu0
          %v512 = vadd.f32 0.0, %v511
          %513 = vmatmul.f32.gmra.mxu0 %v402
          %v514 = vpop.f32.mrf.mxu0
          %v515 = vadd.f32 0.0, %v514
          %516 = vmatmul.f32.gmra.mxu0 %v405
          %v517 = vpop.f32.mrf.mxu0
          %v518 = vadd.f32 0.0, %v517
          %519 = vmatmul.f32.gmra.mxu0 %v408
          %v520 = vpop.f32.mrf.mxu0
          %v521 = vadd.f32 0.0, %v520
          %522 = vmatmul.f32.gmra.mxu0 %v411
          %v523 = vpop.f32.mrf.mxu0
          %v524 = vadd.f32 0.0, %v523
          %525 = vmatmul.f32.gmra.mxu0 %v414
          %v526 = vpop.f32.mrf.mxu0
          %v527 = vadd.f32 0.0, %v526
          %528 = vmatmul.f32.gmra.mxu0 %v417
          %v529 = vpop.f32.mrf.mxu0
          %v530 = vadd.f32 0.0, %v529
          %531 = vmatmul.f32.gmra.mxu0 %v420
          %v532 = vpop.f32.mrf.mxu0
          %v533 = vadd.f32 0.0, %v532
          %534 = vmatmul.f32.gmra.mxu0 %v423
          %v535 = vpop.f32.mrf.mxu0
          %v536 = vadd.f32 0.0, %v535
          %537 = vmatmul.f32.gmra.mxu0 %v426
          %v538 = vpop.f32.mrf.mxu0
          %v539 = vadd.f32 0.0, %v538
          %540 = vmatmul.f32.gmra.mxu0 %v429
          %v541 = vpop.f32.mrf.mxu0
          %v542 = vadd.f32 0.0, %v541
          %543 = vmatmul.f32.gmra.mxu0 %v432
          %v544 = vpop.f32.mrf.mxu0
          %v545 = vadd.f32 0.0, %v544
          %546 = vmatmul.f32.gmra.mxu0 %v435
          %v547 = vpop.f32.mrf.mxu0
          %v548 = vadd.f32 0.0, %v547
          %549 = vmatmul.f32.gmra.mxu0 %v438
          %v550 = vpop.f32.mrf.mxu0
          %v551 = vadd.f32 0.0, %v550
          %552 = vmatmul.f32.gmra.mxu0 %v441
          %v553 = vpop.f32.mrf.mxu0
          %v554 = vadd.f32 0.0, %v553
          %555 = vmatmul.f32.gmra.mxu0 %v444
          %v556 = vpop.f32.mrf.mxu0
          %v557 = vadd.f32 0.0, %v556
          %558 = vdwg.mxu0
          %v559 = vpack.c.bf16 %v464, %v464
          %v560 = vpack.c.bf16 %v467, %v467
          %v561 = vpack.c.bf16 %v470, %v470
          %v562 = vpack.c.bf16 %v473, %v473
          %v563 = vpack.c.bf16 %v476, %v476
          %v564 = vpack.c.bf16 %v479, %v479
          %v565 = vpack.c.bf16 %v482, %v482
          %v566 = vpack.c.bf16 %v485, %v485
          %v567 = vpack.c.bf16 %v488, %v488
          %v568 = vpack.c.bf16 %v491, %v491
          %v569 = vpack.c.bf16 %v494, %v494
          %v570 = vpack.c.bf16 %v497, %v497
          %v571 = vpack.c.bf16 %v500, %v500
          %v572 = vpack.c.bf16 %v503, %v503
          %v573 = vpack.c.bf16 %v506, %v506
          %v574 = vpack.c.bf16 %v509, %v509
          %v575 = vpack.c.bf16 %v512, %v512
          %v576 = vpack.c.bf16 %v515, %v515
          %v577 = vpack.c.bf16 %v518, %v518
          %v578 = vpack.c.bf16 %v521, %v521
          %v579 = vpack.c.bf16 %v524, %v524
          %v580 = vpack.c.bf16 %v527, %v527
          %v581 = vpack.c.bf16 %v530, %v530
          %v582 = vpack.c.bf16 %v533, %v533
          %v583 = vpack.c.bf16 %v536, %v536
          %v584 = vpack.c.bf16 %v539, %v539
          %v585 = vpack.c.bf16 %v542, %v542
          %v586 = vpack.c.bf16 %v545, %v545
          %v587 = vpack.c.bf16 %v548, %v548
          %v588 = vpack.c.bf16 %v551, %v551
          %v589 = vpack.c.bf16 %v554, %v554
          %v590 = vpack.c.bf16 %v557, %v557
          %591 = vst [vmem:[#allocation2] sm:$0xf] %v559
          %592 = vst [vmem:[#allocation2 + $0x4] sm:$0xf] %v560
          %593 = vst [vmem:[#allocation2 + $0x8] sm:$0xf] %v561
          %594 = vst [vmem:[#allocation2 + $0xc] sm:$0xf] %v562
          %595 = vst [vmem:[#allocation2 + $0x10] sm:$0xf] %v563
          %596 = vst [vmem:[#allocation2 + $0x14] sm:$0xf] %v564
          %597 = vst [vmem:[#allocation2 + $0x18] sm:$0xf] %v565
          %598 = vst [vmem:[#allocation2 + $0x1c] sm:$0xf] %v566
          %599 = vst [vmem:[#allocation2 + $0x20] sm:$0xf] %v567
          %600 = vst [vmem:[#allocation2 + $0x24] sm:$0xf] %v568
          %601 = vst [vmem:[#allocation2 + $0x28] sm:$0xf] %v569
          %602 = vst [vmem:[#allocation2 + $0x2c] sm:$0xf] %v570
          %603 = vst [vmem:[#allocation2 + $0x30] sm:$0xf] %v571
          %604 = vst [vmem:[#allocation2 + $0x34] sm:$0xf] %v572
          %605 = vst [vmem:[#allocation2 + $0x38] sm:$0xf] %v573
          %606 = vst [vmem:[#allocation2 + $0x3c] sm:$0xf] %v574
          %607 = vst [vmem:[#allocation2 + $0x40] sm:$0xf] %v575
          %608 = vst [vmem:[#allocation2 + $0x44] sm:$0xf] %v576
          %609 = vst [vmem:[#allocation2 + $0x48] sm:$0xf] %v577
          %610 = vst [vmem:[#allocation2 + $0x4c] sm:$0xf] %v578
          %611 = vst [vmem:[#allocation2 + $0x50] sm:$0xf] %v579
          %612 = vst [vmem:[#allocation2 + $0x54] sm:$0xf] %v580
          %613 = vst [vmem:[#allocation2 + $0x58] sm:$0xf] %v581
          %614 = vst [vmem:[#allocation2 + $0x5c] sm:$0xf] %v582
          %615 = vst [vmem:[#allocation2 + $0x60] sm:$0xf] %v583
          %616 = vst [vmem:[#allocation2 + $0x64] sm:$0xf] %v584
          %617 = vst [vmem:[#allocation2 + $0x68] sm:$0xf] %v585
          %618 = vst [vmem:[#allocation2 + $0x6c] sm:$0xf] %v586
          %619 = vst [vmem:[#allocation2 + $0x70] sm:$0xf] %v587
          %620 = vst [vmem:[#allocation2 + $0x74] sm:$0xf] %v588
          %621 = vst [vmem:[#allocation2 + $0x78] sm:$0xf] %v589
          %622 = vst [vmem:[#allocation2 + $0x7c] sm:$0xf] %v590
        $region56: #{tpu_custom_call.1} parent=43 // pred_fallthru
          _
        %v623 = vld [vmem:[%s299] sm:$0xff]
        %v624 = vld [vmem:[%s299 + $0x8] sm:$0xff]
        %v625 = vld [vmem:[%s299 + $0x10] sm:$0xff]
        %v626 = vld [vmem:[%s299 + $0x18] sm:$0xff]
        %v627 = vld [vmem:[%s299 + $0x20] sm:$0xff]
        %v628 = vld [vmem:[%s299 + $0x28] sm:$0xff]
        %v629 = vld [vmem:[%s299 + $0x30] sm:$0xff]
        %v630 = vld [vmem:[%s299 + $0x38] sm:$0xff]
        %v631 = vld [vmem:[%s299 + $0x40] sm:$0xff]
        %v632 = vld [vmem:[%s299 + $0x48] sm:$0xff]
        %v633 = vld [vmem:[%s299 + $0x50] sm:$0xff]
        %v634 = vld [vmem:[%s299 + $0x58] sm:$0xff]
        %v635 = vld [vmem:[%s299 + $0x60] sm:$0xff]
        %v636 = vld [vmem:[%s299 + $0x68] sm:$0xff]
        %v637 = vld [vmem:[%s299 + $0x70] sm:$0xff]
        %v638 = vld [vmem:[%s299 + $0x78] sm:$0xff]
        // Predicated region
        $region57: #{tpu_custom_call.1} parent=43 // pred_check
          %p639 = pneg %p303
        $region58: #{tpu_custom_call.1} parent=43 // pred_check_branch
          %641 = sbr.rel (%p639) target = $region60
        $region59: #{tpu_custom_call.1} parent=43 // pred_region
          %v642 = vld [vmem:[#allocation2] sm:$0xf]
          %v643 = vld [vmem:[#allocation2 + $0x4] sm:$0xf]
          %v644 = vld [vmem:[#allocation2 + $0x8] sm:$0xf]
          %v645 = vld [vmem:[#allocation2 + $0xc] sm:$0xf]
          %v646 = vld [vmem:[#allocation2 + $0x10] sm:$0xf]
          %v647 = vld [vmem:[#allocation2 + $0x14] sm:$0xf]
          %v648 = vld [vmem:[#allocation2 + $0x18] sm:$0xf]
          %v649 = vld [vmem:[#allocation2 + $0x1c] sm:$0xf]
          %v650 = vld [vmem:[#allocation2 + $0x20] sm:$0xf]
          %v651 = vld [vmem:[#allocation2 + $0x24] sm:$0xf]
          %v652 = vld [vmem:[#allocation2 + $0x28] sm:$0xf]
          %v653 = vld [vmem:[#allocation2 + $0x2c] sm:$0xf]
          %v654 = vld [vmem:[#allocation2 + $0x30] sm:$0xf]
          %v655 = vld [vmem:[#allocation2 + $0x34] sm:$0xf]
          %v656 = vld [vmem:[#allocation2 + $0x38] sm:$0xf]
          %v657 = vld [vmem:[#allocation2 + $0x3c] sm:$0xf]
          %v658 = vld [vmem:[#allocation2 + $0x40] sm:$0xf]
          %v659 = vld [vmem:[#allocation2 + $0x44] sm:$0xf]
          %v660 = vld [vmem:[#allocation2 + $0x48] sm:$0xf]
          %v661 = vld [vmem:[#allocation2 + $0x4c] sm:$0xf]
          %v662 = vld [vmem:[#allocation2 + $0x50] sm:$0xf]
          %v663 = vld [vmem:[#allocation2 + $0x54] sm:$0xf]
          %v664 = vld [vmem:[#allocation2 + $0x58] sm:$0xf]
          %v665 = vld [vmem:[#allocation2 + $0x5c] sm:$0xf]
          %v666 = vld [vmem:[#allocation2 + $0x60] sm:$0xf]
          %v667 = vld [vmem:[#allocation2 + $0x64] sm:$0xf]
          %v668 = vld [vmem:[#allocation2 + $0x68] sm:$0xf]
          %v669 = vld [vmem:[#allocation2 + $0x6c] sm:$0xf]
          %v670 = vld [vmem:[#allocation2 + $0x70] sm:$0xf]
          %v671 = vld [vmem:[#allocation2 + $0x74] sm:$0xf]
          %v672 = vld [vmem:[#allocation2 + $0x78] sm:$0xf]
          %v673 = vld [vmem:[#allocation2 + $0x7c] sm:$0xf]
          %v674 = vld [vmem:[#allocation8] sm:$0x1]
          %v676 = vperm.slane %v674, 0
          %v694 = vunpack.c.l.b16 %v623
          %v695 = vunpack.c.h.b16 %v623
          %v696 = vunpack.c.l.b16 %v624
          %v697 = vunpack.c.h.b16 %v624
          %v698 = vunpack.c.l.b16 %v625
          %v699 = vunpack.c.h.b16 %v625
          %v700 = vunpack.c.l.b16 %v626
          %v701 = vunpack.c.h.b16 %v626
          %v702 = vunpack.c.l.b16 %v627
          %v703 = vunpack.c.h.b16 %v627
          %v704 = vunpack.c.l.b16 %v628
          %v705 = vunpack.c.h.b16 %v628
          %v706 = vunpack.c.l.b16 %v629
          %v707 = vunpack.c.h.b16 %v629
          %v708 = vunpack.c.l.b16 %v630
          %v709 = vunpack.c.h.b16 %v630
          %v710 = vunpack.c.l.b16 %v631
          %v711 = vunpack.c.h.b16 %v631
          %v712 = vunpack.c.l.b16 %v632
          %v713 = vunpack.c.h.b16 %v632
          %v714 = vunpack.c.l.b16 %v633
          %v715 = vunpack.c.h.b16 %v633
          %v716 = vunpack.c.l.b16 %v634
          %v717 = vunpack.c.h.b16 %v634
          %v718 = vunpack.c.l.b16 %v635
          %v719 = vunpack.c.h.b16 %v635
          %v720 = vunpack.c.l.b16 %v636
          %v721 = vunpack.c.h.b16 %v636
          %v722 = vunpack.c.l.b16 %v637
          %v723 = vunpack.c.h.b16 %v637
          %v724 = vunpack.c.l.b16 %v638
          %v725 = vunpack.c.h.b16 %v638
          %v726 = vpack.c.b16 %v696, %v694
          %v727 = vpack.c.b16 %v697, %v695
          %v728 = vpack.c.b16 %v700, %v698
          %v729 = vpack.c.b16 %v701, %v699
          %v730 = vpack.c.b16 %v704, %v702
          %v731 = vpack.c.b16 %v705, %v703
          %v732 = vpack.c.b16 %v708, %v706
          %v733 = vpack.c.b16 %v709, %v707
          %v734 = vpack.c.b16 %v712, %v710
          %v735 = vpack.c.b16 %v713, %v711
          %v736 = vpack.c.b16 %v716, %v714
          %v737 = vpack.c.b16 %v717, %v715
          %v738 = vpack.c.b16 %v720, %v718
          %v739 = vpack.c.b16 %v721, %v719
          %v740 = vpack.c.b16 %v724, %v722
          %v741 = vpack.c.b16 %v725, %v723
          %v790 = vunpack.c.l.b16 %v642
          %v791 = vunpack.c.l.b16 %v643
          %v792 = vunpack.c.l.b16 %v644
          %v793 = vunpack.c.l.b16 %v645
          %v794 = vunpack.c.l.b16 %v646
          %v795 = vunpack.c.l.b16 %v647
          %v796 = vunpack.c.l.b16 %v648
          %v797 = vunpack.c.l.b16 %v649
          %v798 = vunpack.c.l.b16 %v650
          %v799 = vunpack.c.l.b16 %v651
          %v800 = vunpack.c.l.b16 %v652
          %v801 = vunpack.c.l.b16 %v653
          %v802 = vunpack.c.l.b16 %v654
          %v803 = vunpack.c.l.b16 %v655
          %v804 = vunpack.c.l.b16 %v656
          %v805 = vunpack.c.l.b16 %v657
          %v806 = vunpack.c.l.b16 %v658
          %v807 = vunpack.c.l.b16 %v659
          %v808 = vunpack.c.l.b16 %v660
          %v809 = vunpack.c.l.b16 %v661
          %v810 = vunpack.c.l.b16 %v662
          %v811 = vunpack.c.l.b16 %v663
          %v812 = vunpack.c.l.b16 %v664
          %v813 = vunpack.c.l.b16 %v665
          %v814 = vunpack.c.l.b16 %v666
          %v815 = vunpack.c.l.b16 %v667
          %v816 = vunpack.c.l.b16 %v668
          %v817 = vunpack.c.l.b16 %v669
          %v818 = vunpack.c.l.b16 %v670
          %v819 = vunpack.c.l.b16 %v671
          %v820 = vunpack.c.l.b16 %v672
          %v821 = vunpack.c.l.b16 %v673
          %v822 = vpack.c.b16 %v791, %v790
          %v823 = vpack.c.b16 %v793, %v792
          %v824 = vpack.c.b16 %v795, %v794
          %v825 = vpack.c.b16 %v797, %v796
          %v826 = vpack.c.b16 %v799, %v798
          %v827 = vpack.c.b16 %v801, %v800
          %v828 = vpack.c.b16 %v803, %v802
          %v829 = vpack.c.b16 %v805, %v804
          %v830 = vpack.c.b16 %v807, %v806
          %v831 = vpack.c.b16 %v809, %v808
          %v832 = vpack.c.b16 %v811, %v810
          %v833 = vpack.c.b16 %v813, %v812
          %v834 = vpack.c.b16 %v815, %v814
          %v835 = vpack.c.b16 %v817, %v816
          %v836 = vpack.c.b16 %v819, %v818
          %v837 = vpack.c.b16 %v821, %v820
          %854 = vmatpush.bf16.msra.mxu0 %v829
          %855 = vmatpush.bf16.msra.mxu0 %v828
          %856 = vmatpush.bf16.msra.mxu0 %v827
          %857 = vmatpush.bf16.msra.mxu0 %v826
          %858 = vmatpush.bf16.msra.mxu0 %v825
          %859 = vmatpush.bf16.msra.mxu0 %v824
          %860 = vmatpush.bf16.msra.mxu0 %v823
          %861 = vmatpush.bf16.msra.mxu0 %v822
          %862 = vmatmul.bf16.gmra.mxu0 %v726
          %v863 = vpop.f32.mrf.mxu0
          %v864 = vadd.f32 %v676, %v863
          %v865 = vpop.f32.mrf.mxu0
          %v866 = vadd.f32 %v676, %v865
          %867 = vmatmul.bf16.gmra.mxu0 %v728
          %v868 = vpop.f32.mrf.mxu0
          %v869 = vadd.f32 %v676, %v868
          %v870 = vpop.f32.mrf.mxu0
          %v871 = vadd.f32 %v676, %v870
          %872 = vmatmul.bf16.gmra.mxu0 %v730
          %v873 = vpop.f32.mrf.mxu0
          %v874 = vadd.f32 %v676, %v873
          %v875 = vpop.f32.mrf.mxu0
          %v876 = vadd.f32 %v676, %v875
          %877 = vmatmul.bf16.gmra.mxu0 %v732
          %v878 = vpop.f32.mrf.mxu0
          %v879 = vadd.f32 %v676, %v878
          %v880 = vpop.f32.mrf.mxu0
          %v881 = vadd.f32 %v676, %v880
          %882 = vmatmul.bf16.gmra.mxu0 %v734
          %v883 = vpop.f32.mrf.mxu0
          %v884 = vadd.f32 %v676, %v883
          %v885 = vpop.f32.mrf.mxu0
          %v886 = vadd.f32 %v676, %v885
          %887 = vmatmul.bf16.gmra.mxu0 %v736
          %v888 = vpop.f32.mrf.mxu0
          %v889 = vadd.f32 %v676, %v888
          %v890 = vpop.f32.mrf.mxu0
          %v891 = vadd.f32 %v676, %v890
          %892 = vmatmul.bf16.gmra.mxu0 %v738
          %v893 = vpop.f32.mrf.mxu0
          %v894 = vadd.f32 %v676, %v893
          %v895 = vpop.f32.mrf.mxu0
          %v896 = vadd.f32 %v676, %v895
          %897 = vmatmul.bf16.gmra.mxu0 %v740
          %v898 = vpop.f32.mrf.mxu0
          %v899 = vadd.f32 %v676, %v898
          %v900 = vpop.f32.mrf.mxu0
          %v901 = vadd.f32 %v676, %v900
          %902 = vdwg.mxu0
          %903 = vmatpush.bf16.msra.mxu0 %v837
          %904 = vmatpush.bf16.msra.mxu0 %v836
          %905 = vmatpush.bf16.msra.mxu0 %v835
          %906 = vmatpush.bf16.msra.mxu0 %v834
          %907 = vmatpush.bf16.msra.mxu0 %v833
          %908 = vmatpush.bf16.msra.mxu0 %v832
          %909 = vmatpush.bf16.msra.mxu0 %v831
          %910 = vmatpush.bf16.msra.mxu0 %v830
          %911 = vmatmul.bf16.gmra.mxu0 %v727
          %v912 = vpop.f32.mrf.mxu0
          %v913 = vadd.f32 %v864, %v912
          %v914 = vpop.f32.mrf.mxu0
          %v915 = vadd.f32 %v866, %v914
          %916 = vmatmul.bf16.gmra.mxu0 %v729
          %v917 = vpop.f32.mrf.mxu0
          %v918 = vadd.f32 %v869, %v917
          %v919 = vpop.f32.mrf.mxu0
          %v920 = vadd.f32 %v871, %v919
          %921 = vmatmul.bf16.gmra.mxu0 %v731
          %v922 = vpop.f32.mrf.mxu0
          %v923 = vadd.f32 %v874, %v922
          %v924 = vpop.f32.mrf.mxu0
          %v925 = vadd.f32 %v876, %v924
          %926 = vmatmul.bf16.gmra.mxu0 %v733
          %v927 = vpop.f32.mrf.mxu0
          %v928 = vadd.f32 %v879, %v927
          %v929 = vpop.f32.mrf.mxu0
          %v930 = vadd.f32 %v881, %v929
          %931 = vmatmul.bf16.gmra.mxu0 %v735
          %v932 = vpop.f32.mrf.mxu0
          %v933 = vadd.f32 %v884, %v932
          %v934 = vpop.f32.mrf.mxu0
          %v935 = vadd.f32 %v886, %v934
          %936 = vmatmul.bf16.gmra.mxu0 %v737
          %v937 = vpop.f32.mrf.mxu0
          %v938 = vadd.f32 %v889, %v937
          %v939 = vpop.f32.mrf.mxu0
          %v940 = vadd.f32 %v891, %v939
          %941 = vmatmul.bf16.gmra.mxu0 %v739
          %v942 = vpop.f32.mrf.mxu0
          %v943 = vadd.f32 %v894, %v942
          %v944 = vpop.f32.mrf.mxu0
          %v945 = vadd.f32 %v896, %v944
          %946 = vmatmul.bf16.gmra.mxu0 %v741
          %v947 = vpop.f32.mrf.mxu0
          %v948 = vadd.f32 %v899, %v947
          %v949 = vpop.f32.mrf.mxu0
          %v950 = vadd.f32 %v901, %v949
          %951 = vdwg.mxu0
          %v952 = vmax.f32 %v913, 0.0
          %v953 = vmax.f32 %v915, 0.0
          %v954 = vmax.f32 %v918, 0.0
          %v955 = vmax.f32 %v920, 0.0
          %v956 = vmax.f32 %v923, 0.0
          %v957 = vmax.f32 %v925, 0.0
          %v958 = vmax.f32 %v928, 0.0
          %v959 = vmax.f32 %v930, 0.0
          %v960 = vmax.f32 %v933, 0.0
          %v961 = vmax.f32 %v935, 0.0
          %v962 = vmax.f32 %v938, 0.0
          %v963 = vmax.f32 %v940, 0.0
          %v964 = vmax.f32 %v943, 0.0
          %v965 = vmax.f32 %v945, 0.0
          %v966 = vmax.f32 %v948, 0.0
          %v967 = vmax.f32 %v950, 0.0
          %s968 = smul.u32 %s27, 128
          %s969 = scalar_lea.vmem [#allocation3], %s968
          %970 = vst [vmem:[%s969] sm:$0xff] %v952
          %971 = vst [vmem:[%s969 + $0x8] sm:$0xff] %v953
          %972 = vst [vmem:[%s969 + $0x10] sm:$0xff] %v954
          %973 = vst [vmem:[%s969 + $0x18] sm:$0xff] %v955
          %974 = vst [vmem:[%s969 + $0x20] sm:$0xff] %v956
          %975 = vst [vmem:[%s969 + $0x28] sm:$0xff] %v957
          %976 = vst [vmem:[%s969 + $0x30] sm:$0xff] %v958
          %977 = vst [vmem:[%s969 + $0x38] sm:$0xff] %v959
          %978 = vst [vmem:[%s969 + $0x40] sm:$0xff] %v960
          %979 = vst [vmem:[%s969 + $0x48] sm:$0xff] %v961
          %980 = vst [vmem:[%s969 + $0x50] sm:$0xff] %v962
          %981 = vst [vmem:[%s969 + $0x58] sm:$0xff] %v963
          %982 = vst [vmem:[%s969 + $0x60] sm:$0xff] %v964
          %983 = vst [vmem:[%s969 + $0x68] sm:$0xff] %v965
          %984 = vst [vmem:[%s969 + $0x70] sm:$0xff] %v966
          %985 = vst [vmem:[%s969 + $0x78] sm:$0xff] %v967
        $region60: #{tpu_custom_call.1} parent=43 // pred_fallthru
          _
        %p986 = scmp.eq.s32.totalorder %s26, 1
        %p987 = pnand %p986, %p304
        %p988 = pneg %p987
        // Predicated region
        $region61: #{tpu_custom_call.1} parent=43 // pred_check
          _
        $region62: #{tpu_custom_call.1} parent=43 // pred_check_branch
          %990 = sbr.rel (%p987) target = $region64
        $region63: #{tpu_custom_call.1} parent=43 // pred_region
          %v991 = vld [vmem:[#allocation3] sm:$0xff]
          %v992 = vld [vmem:[#allocation3 + $0x8] sm:$0xff]
          %v993 = vld [vmem:[#allocation3 + $0x10] sm:$0xff]
          %v994 = vld [vmem:[#allocation3 + $0x18] sm:$0xff]
          %v995 = vld [vmem:[#allocation3 + $0x20] sm:$0xff]
          %v996 = vld [vmem:[#allocation3 + $0x28] sm:$0xff]
          %v997 = vld [vmem:[#allocation3 + $0x30] sm:$0xff]
          %v998 = vld [vmem:[#allocation3 + $0x38] sm:$0xff]
          %v999 = vld [vmem:[#allocation3 + $0x40] sm:$0xff]
          %v1000 = vld [vmem:[#allocation3 + $0x48] sm:$0xff]
          %v1001 = vld [vmem:[#allocation3 + $0x50] sm:$0xff]
          %v1002 = vld [vmem:[#allocation3 + $0x58] sm:$0xff]
          %v1003 = vld [vmem:[#allocation3 + $0x60] sm:$0xff]
          %v1004 = vld [vmem:[#allocation3 + $0x68] sm:$0xff]
          %v1005 = vld [vmem:[#allocation3 + $0x70] sm:$0xff]
          %v1006 = vld [vmem:[#allocation3 + $0x78] sm:$0xff]
          %v1007 = vld [vmem:[#allocation3 + $0x80] sm:$0xff]
          %v1008 = vld [vmem:[#allocation3 + $0x88] sm:$0xff]
          %v1009 = vld [vmem:[#allocation3 + $0x90] sm:$0xff]
          %v1010 = vld [vmem:[#allocation3 + $0x98] sm:$0xff]
          %v1011 = vld [vmem:[#allocation3 + $0xa0] sm:$0xff]
          %v1012 = vld [vmem:[#allocation3 + $0xa8] sm:$0xff]
          %v1013 = vld [vmem:[#allocation3 + $0xb0] sm:$0xff]
          %v1014 = vld [vmem:[#allocation3 + $0xb8] sm:$0xff]
          %v1015 = vld [vmem:[#allocation3 + $0xc0] sm:$0xff]
          %v1016 = vld [vmem:[#allocation3 + $0xc8] sm:$0xff]
          %v1017 = vld [vmem:[#allocation3 + $0xd0] sm:$0xff]
          %v1018 = vld [vmem:[#allocation3 + $0xd8] sm:$0xff]
          %v1019 = vld [vmem:[#allocation3 + $0xe0] sm:$0xff]
          %v1020 = vld [vmem:[#allocation3 + $0xe8] sm:$0xff]
          %v1021 = vld [vmem:[#allocation3 + $0xf0] sm:$0xff]
          %v1022 = vld [vmem:[#allocation3 + $0xf8] sm:$0xff]
          %v1023 = vld [vmem:[%s4] sm:$0xff]
          %v1024 = vld [vmem:[%s4 + $0x8] sm:$0xff]
          %v1025 = vld [vmem:[%s4 + $0x10] sm:$0xff]
          %v1026 = vld [vmem:[%s4 + $0x18] sm:$0xff]
          %v1027 = vld [vmem:[%s4 + $0x20] sm:$0xff]
          %v1028 = vld [vmem:[%s4 + $0x28] sm:$0xff]
          %v1029 = vld [vmem:[%s4 + $0x30] sm:$0xff]
          %v1030 = vld [vmem:[%s4 + $0x38] sm:$0xff]
          %v1031 = vld [vmem:[%s4 + $0x40] sm:$0xff]
          %v1032 = vld [vmem:[%s4 + $0x48] sm:$0xff]
          %v1033 = vld [vmem:[%s4 + $0x50] sm:$0xff]
          %v1034 = vld [vmem:[%s4 + $0x58] sm:$0xff]
          %v1035 = vld [vmem:[%s4 + $0x60] sm:$0xff]
          %v1036 = vld [vmem:[%s4 + $0x68] sm:$0xff]
          %v1037 = vld [vmem:[%s4 + $0x70] sm:$0xff]
          %v1038 = vld [vmem:[%s4 + $0x78] sm:$0xff]
          %1039 = vmatpush.msra.mxu0 %v1038
          %1040 = vmatpush.msra.mxu0 %v1037
          %1041 = vmatpush.msra.mxu0 %v1036
          %1042 = vmatpush.msra.mxu0 %v1035
          %1043 = vmatpush.msra.mxu0 %v1034
          %1044 = vmatpush.msra.mxu0 %v1033
          %1045 = vmatpush.msra.mxu0 %v1032
          %1046 = vmatpush.msra.mxu0 %v1031
          %1047 = vmatpush.msra.mxu0 %v1030
          %1048 = vmatpush.msra.mxu0 %v1029
          %1049 = vmatpush.msra.mxu0 %v1028
          %1050 = vmatpush.msra.mxu0 %v1027
          %1051 = vmatpush.msra.mxu0 %v1026
          %1052 = vmatpush.msra.mxu0 %v1025
          %1053 = vmatpush.msra.mxu0 %v1024
          %1054 = vmatpush.msra.mxu0 %v1023
          %1055 = vmatmul.f32.gmra.mxu0 %v991
          %v1056 = vpop.f32.mrf.mxu0
          %v1057 = vadd.f32 0.0, %v1056
          %1058 = vmatmul.f32.gmra.mxu0 %v992
          %v1059 = vpop.f32.mrf.mxu0
          %v1060 = vadd.f32 0.0, %v1059
          %1061 = vmatmul.f32.gmra.mxu0 %v993
          %v1062 = vpop.f32.mrf.mxu0
          %v1063 = vadd.f32 0.0, %v1062
          %1064 = vmatmul.f32.gmra.mxu0 %v994
          %v1065 = vpop.f32.mrf.mxu0
          %v1066 = vadd.f32 0.0, %v1065
          %1067 = vmatmul.f32.gmra.mxu0 %v995
          %v1068 = vpop.f32.mrf.mxu0
          %v1069 = vadd.f32 0.0, %v1068
          %1070 = vmatmul.f32.gmra.mxu0 %v996
          %v1071 = vpop.f32.mrf.mxu0
          %v1072 = vadd.f32 0.0, %v1071
          %1073 = vmatmul.f32.gmra.mxu0 %v997
          %v1074 = vpop.f32.mrf.mxu0
          %v1075 = vadd.f32 0.0, %v1074
          %1076 = vmatmul.f32.gmra.mxu0 %v998
          %v1077 = vpop.f32.mrf.mxu0
          %v1078 = vadd.f32 0.0, %v1077
          %1079 = vmatmul.f32.gmra.mxu0 %v999
          %v1080 = vpop.f32.mrf.mxu0
          %v1081 = vadd.f32 0.0, %v1080
          %1082 = vmatmul.f32.gmra.mxu0 %v1000
          %v1083 = vpop.f32.mrf.mxu0
          %v1084 = vadd.f32 0.0, %v1083
          %1085 = vmatmul.f32.gmra.mxu0 %v1001
          %v1086 = vpop.f32.mrf.mxu0
          %v1087 = vadd.f32 0.0, %v1086
          %1088 = vmatmul.f32.gmra.mxu0 %v1002
          %v1089 = vpop.f32.mrf.mxu0
          %v1090 = vadd.f32 0.0, %v1089
          %1091 = vmatmul.f32.gmra.mxu0 %v1003
          %v1092 = vpop.f32.mrf.mxu0
          %v1093 = vadd.f32 0.0, %v1092
          %1094 = vmatmul.f32.gmra.mxu0 %v1004
          %v1095 = vpop.f32.mrf.mxu0
          %v1096 = vadd.f32 0.0, %v1095
          %1097 = vmatmul.f32.gmra.mxu0 %v1005
          %v1098 = vpop.f32.mrf.mxu0
          %v1099 = vadd.f32 0.0, %v1098
          %1100 = vmatmul.f32.gmra.mxu0 %v1006
          %v1101 = vpop.f32.mrf.mxu0
          %v1102 = vadd.f32 0.0, %v1101
          %1103 = vmatmul.f32.gmra.mxu0 %v1007
          %v1104 = vpop.f32.mrf.mxu0
          %v1105 = vadd.f32 0.0, %v1104
          %1106 = vmatmul.f32.gmra.mxu0 %v1008
          %v1107 = vpop.f32.mrf.mxu0
          %v1108 = vadd.f32 0.0, %v1107
          %1109 = vmatmul.f32.gmra.mxu0 %v1009
          %v1110 = vpop.f32.mrf.mxu0
          %v1111 = vadd.f32 0.0, %v1110
          %1112 = vmatmul.f32.gmra.mxu0 %v1010
          %v1113 = vpop.f32.mrf.mxu0
          %v1114 = vadd.f32 0.0, %v1113
          %1115 = vmatmul.f32.gmra.mxu0 %v1011
          %v1116 = vpop.f32.mrf.mxu0
          %v1117 = vadd.f32 0.0, %v1116
          %1118 = vmatmul.f32.gmra.mxu0 %v1012
          %v1119 = vpop.f32.mrf.mxu0
          %v1120 = vadd.f32 0.0, %v1119
          %1121 = vmatmul.f32.gmra.mxu0 %v1013
          %v1122 = vpop.f32.mrf.mxu0
          %v1123 = vadd.f32 0.0, %v1122
          %1124 = vmatmul.f32.gmra.mxu0 %v1014
          %v1125 = vpop.f32.mrf.mxu0
          %v1126 = vadd.f32 0.0, %v1125
          %1127 = vmatmul.f32.gmra.mxu0 %v1015
          %v1128 = vpop.f32.mrf.mxu0
          %v1129 = vadd.f32 0.0, %v1128
          %1130 = vmatmul.f32.gmra.mxu0 %v1016
          %v1131 = vpop.f32.mrf.mxu0
          %v1132 = vadd.f32 0.0, %v1131
          %1133 = vmatmul.f32.gmra.mxu0 %v1017
          %v1134 = vpop.f32.mrf.mxu0
          %v1135 = vadd.f32 0.0, %v1134
          %1136 = vmatmul.f32.gmra.mxu0 %v1018
          %v1137 = vpop.f32.mrf.mxu0
          %v1138 = vadd.f32 0.0, %v1137
          %1139 = vmatmul.f32.gmra.mxu0 %v1019
          %v1140 = vpop.f32.mrf.mxu0
          %v1141 = vadd.f32 0.0, %v1140
          %1142 = vmatmul.f32.gmra.mxu0 %v1020
          %v1143 = vpop.f32.mrf.mxu0
          %v1144 = vadd.f32 0.0, %v1143
          %1145 = vmatmul.f32.gmra.mxu0 %v1021
          %v1146 = vpop.f32.mrf.mxu0
          %v1147 = vadd.f32 0.0, %v1146
          %1148 = vmatmul.f32.gmra.mxu0 %v1022
          %v1149 = vpop.f32.mrf.mxu0
          %v1150 = vadd.f32 0.0, %v1149
          %1151 = vdwg.mxu0
          %v1152 = vpack.c.bf16 %v1057, %v1057
          %v1153 = vpack.c.bf16 %v1060, %v1060
          %v1154 = vpack.c.bf16 %v1063, %v1063
          %v1155 = vpack.c.bf16 %v1066, %v1066
          %v1156 = vpack.c.bf16 %v1069, %v1069
          %v1157 = vpack.c.bf16 %v1072, %v1072
          %v1158 = vpack.c.bf16 %v1075, %v1075
          %v1159 = vpack.c.bf16 %v1078, %v1078
          %v1160 = vpack.c.bf16 %v1081, %v1081
          %v1161 = vpack.c.bf16 %v1084, %v1084
          %v1162 = vpack.c.bf16 %v1087, %v1087
          %v1163 = vpack.c.bf16 %v1090, %v1090
          %v1164 = vpack.c.bf16 %v1093, %v1093
          %v1165 = vpack.c.bf16 %v1096, %v1096
          %v1166 = vpack.c.bf16 %v1099, %v1099
          %v1167 = vpack.c.bf16 %v1102, %v1102
          %v1168 = vpack.c.bf16 %v1105, %v1105
          %v1169 = vpack.c.bf16 %v1108, %v1108
          %v1170 = vpack.c.bf16 %v1111, %v1111
          %v1171 = vpack.c.bf16 %v1114, %v1114
          %v1172 = vpack.c.bf16 %v1117, %v1117
          %v1173 = vpack.c.bf16 %v1120, %v1120
          %v1174 = vpack.c.bf16 %v1123, %v1123
          %v1175 = vpack.c.bf16 %v1126, %v1126
          %v1176 = vpack.c.bf16 %v1129, %v1129
          %v1177 = vpack.c.bf16 %v1132, %v1132
          %v1178 = vpack.c.bf16 %v1135, %v1135
          %v1179 = vpack.c.bf16 %v1138, %v1138
          %v1180 = vpack.c.bf16 %v1141, %v1141
          %v1181 = vpack.c.bf16 %v1144, %v1144
          %v1182 = vpack.c.bf16 %v1147, %v1147
          %v1183 = vpack.c.bf16 %v1150, %v1150
          %1184 = vst [vmem:[#allocation4] sm:$0xf] %v1152
          %1185 = vst [vmem:[#allocation4 + $0x4] sm:$0xf] %v1153
          %1186 = vst [vmem:[#allocation4 + $0x8] sm:$0xf] %v1154
          %1187 = vst [vmem:[#allocation4 + $0xc] sm:$0xf] %v1155
          %1188 = vst [vmem:[#allocation4 + $0x10] sm:$0xf] %v1156
          %1189 = vst [vmem:[#allocation4 + $0x14] sm:$0xf] %v1157
          %1190 = vst [vmem:[#allocation4 + $0x18] sm:$0xf] %v1158
          %1191 = vst [vmem:[#allocation4 + $0x1c] sm:$0xf] %v1159
          %1192 = vst [vmem:[#allocation4 + $0x20] sm:$0xf] %v1160
          %1193 = vst [vmem:[#allocation4 + $0x24] sm:$0xf] %v1161
          %1194 = vst [vmem:[#allocation4 + $0x28] sm:$0xf] %v1162
          %1195 = vst [vmem:[#allocation4 + $0x2c] sm:$0xf] %v1163
          %1196 = vst [vmem:[#allocation4 + $0x30] sm:$0xf] %v1164
          %1197 = vst [vmem:[#allocation4 + $0x34] sm:$0xf] %v1165
          %1198 = vst [vmem:[#allocation4 + $0x38] sm:$0xf] %v1166
          %1199 = vst [vmem:[#allocation4 + $0x3c] sm:$0xf] %v1167
          %1200 = vst [vmem:[#allocation4 + $0x40] sm:$0xf] %v1168
          %1201 = vst [vmem:[#allocation4 + $0x44] sm:$0xf] %v1169
          %1202 = vst [vmem:[#allocation4 + $0x48] sm:$0xf] %v1170
          %1203 = vst [vmem:[#allocation4 + $0x4c] sm:$0xf] %v1171
          %1204 = vst [vmem:[#allocation4 + $0x50] sm:$0xf] %v1172
          %1205 = vst [vmem:[#allocation4 + $0x54] sm:$0xf] %v1173
          %1206 = vst [vmem:[#allocation4 + $0x58] sm:$0xf] %v1174
          %1207 = vst [vmem:[#allocation4 + $0x5c] sm:$0xf] %v1175
          %1208 = vst [vmem:[#allocation4 + $0x60] sm:$0xf] %v1176
          %1209 = vst [vmem:[#allocation4 + $0x64] sm:$0xf] %v1177
          %1210 = vst [vmem:[#allocation4 + $0x68] sm:$0xf] %v1178
          %1211 = vst [vmem:[#allocation4 + $0x6c] sm:$0xf] %v1179
          %1212 = vst [vmem:[#allocation4 + $0x70] sm:$0xf] %v1180
          %1213 = vst [vmem:[#allocation4 + $0x74] sm:$0xf] %v1181
          %1214 = vst [vmem:[#allocation4 + $0x78] sm:$0xf] %v1182
          %1215 = vst [vmem:[#allocation4 + $0x7c] sm:$0xf] %v1183
        $region64: #{tpu_custom_call.1} parent=43 // pred_fallthru
          _
        // Predicated region
        $region65: #{tpu_custom_call.1} parent=43 // pred_check
          %p1216 = pneg %p986
        $region66: #{tpu_custom_call.1} parent=43 // pred_check_branch
          %1218 = sbr.rel (%p1216) target = $region68
        $region67: #{tpu_custom_call.1} parent=43 // pred_region
          %v1219 = vld [vmem:[#allocation4] sm:$0xf]
          %v1220 = vld [vmem:[#allocation4 + $0x4] sm:$0xf]
          %v1221 = vld [vmem:[#allocation4 + $0x8] sm:$0xf]
          %v1222 = vld [vmem:[#allocation4 + $0xc] sm:$0xf]
          %v1223 = vld [vmem:[#allocation4 + $0x10] sm:$0xf]
          %v1224 = vld [vmem:[#allocation4 + $0x14] sm:$0xf]
          %v1225 = vld [vmem:[#allocation4 + $0x18] sm:$0xf]
          %v1226 = vld [vmem:[#allocation4 + $0x1c] sm:$0xf]
          %v1227 = vld [vmem:[#allocation4 + $0x20] sm:$0xf]
          %v1228 = vld [vmem:[#allocation4 + $0x24] sm:$0xf]
          %v1229 = vld [vmem:[#allocation4 + $0x28] sm:$0xf]
          %v1230 = vld [vmem:[#allocation4 + $0x2c] sm:$0xf]
          %v1231 = vld [vmem:[#allocation4 + $0x30] sm:$0xf]
          %v1232 = vld [vmem:[#allocation4 + $0x34] sm:$0xf]
          %v1233 = vld [vmem:[#allocation4 + $0x38] sm:$0xf]
          %v1234 = vld [vmem:[#allocation4 + $0x3c] sm:$0xf]
          %v1235 = vld [vmem:[#allocation4 + $0x40] sm:$0xf]
          %v1236 = vld [vmem:[#allocation4 + $0x44] sm:$0xf]
          %v1237 = vld [vmem:[#allocation4 + $0x48] sm:$0xf]
          %v1238 = vld [vmem:[#allocation4 + $0x4c] sm:$0xf]
          %v1239 = vld [vmem:[#allocation4 + $0x50] sm:$0xf]
          %v1240 = vld [vmem:[#allocation4 + $0x54] sm:$0xf]
          %v1241 = vld [vmem:[#allocation4 + $0x58] sm:$0xf]
          %v1242 = vld [vmem:[#allocation4 + $0x5c] sm:$0xf]
          %v1243 = vld [vmem:[#allocation4 + $0x60] sm:$0xf]
          %v1244 = vld [vmem:[#allocation4 + $0x64] sm:$0xf]
          %v1245 = vld [vmem:[#allocation4 + $0x68] sm:$0xf]
          %v1246 = vld [vmem:[#allocation4 + $0x6c] sm:$0xf]
          %v1247 = vld [vmem:[#allocation4 + $0x70] sm:$0xf]
          %v1248 = vld [vmem:[#allocation4 + $0x74] sm:$0xf]
          %v1249 = vld [vmem:[#allocation4 + $0x78] sm:$0xf]
          %v1250 = vld [vmem:[#allocation4 + $0x7c] sm:$0xf]
          %v1251 = vld [vmem:[%s5] sm:$0x1]
          %v1253 = vperm.slane %v1251, 0
          %v1271 = vunpack.c.l.b16 %v623
          %v1272 = vunpack.c.h.b16 %v623
          %v1273 = vunpack.c.l.b16 %v624
          %v1274 = vunpack.c.h.b16 %v624
          %v1275 = vunpack.c.l.b16 %v625
          %v1276 = vunpack.c.h.b16 %v625
          %v1277 = vunpack.c.l.b16 %v626
          %v1278 = vunpack.c.h.b16 %v626
          %v1279 = vunpack.c.l.b16 %v627
          %v1280 = vunpack.c.h.b16 %v627
          %v1281 = vunpack.c.l.b16 %v628
          %v1282 = vunpack.c.h.b16 %v628
          %v1283 = vunpack.c.l.b16 %v629
          %v1284 = vunpack.c.h.b16 %v629
          %v1285 = vunpack.c.l.b16 %v630
          %v1286 = vunpack.c.h.b16 %v630
          %v1287 = vunpack.c.l.b16 %v631
          %v1288 = vunpack.c.h.b16 %v631
          %v1289 = vunpack.c.l.b16 %v632
          %v1290 = vunpack.c.h.b16 %v632
          %v1291 = vunpack.c.l.b16 %v633
          %v1292 = vunpack.c.h.b16 %v633
          %v1293 = vunpack.c.l.b16 %v634
          %v1294 = vunpack.c.h.b16 %v634
          %v1295 = vunpack.c.l.b16 %v635
          %v1296 = vunpack.c.h.b16 %v635
          %v1297 = vunpack.c.l.b16 %v636
          %v1298 = vunpack.c.h.b16 %v636
          %v1299 = vunpack.c.l.b16 %v637
          %v1300 = vunpack.c.h.b16 %v637
          %v1301 = vunpack.c.l.b16 %v638
          %v1302 = vunpack.c.h.b16 %v638
          %v1303 = vpack.c.b16 %v1273, %v1271
          %v1304 = vpack.c.b16 %v1274, %v1272
          %v1305 = vpack.c.b16 %v1277, %v1275
          %v1306 = vpack.c.b16 %v1278, %v1276
          %v1307 = vpack.c.b16 %v1281, %v1279
          %v1308 = vpack.c.b16 %v1282, %v1280
          %v1309 = vpack.c.b16 %v1285, %v1283
          %v1310 = vpack.c.b16 %v1286, %v1284
          %v1311 = vpack.c.b16 %v1289, %v1287
          %v1312 = vpack.c.b16 %v1290, %v1288
          %v1313 = vpack.c.b16 %v1293, %v1291
          %v1314 = vpack.c.b16 %v1294, %v1292
          %v1315 = vpack.c.b16 %v1297, %v1295
          %v1316 = vpack.c.b16 %v1298, %v1296
          %v1317 = vpack.c.b16 %v1301, %v1299
          %v1318 = vpack.c.b16 %v1302, %v1300
          %v1367 = vunpack.c.l.b16 %v1219
          %v1368 = vunpack.c.l.b16 %v1220
          %v1369 = vunpack.c.l.b16 %v1221
          %v1370 = vunpack.c.l.b16 %v1222
          %v1371 = vunpack.c.l.b16 %v1223
          %v1372 = vunpack.c.l.b16 %v1224
          %v1373 = vunpack.c.l.b16 %v1225
          %v1374 = vunpack.c.l.b16 %v1226
          %v1375 = vunpack.c.l.b16 %v1227
          %v1376 = vunpack.c.l.b16 %v1228
          %v1377 = vunpack.c.l.b16 %v1229
          %v1378 = vunpack.c.l.b16 %v1230
          %v1379 = vunpack.c.l.b16 %v1231
          %v1380 = vunpack.c.l.b16 %v1232
          %v1381 = vunpack.c.l.b16 %v1233
          %v1382 = vunpack.c.l.b16 %v1234
          %v1383 = vunpack.c.l.b16 %v1235
          %v1384 = vunpack.c.l.b16 %v1236
          %v1385 = vunpack.c.l.b16 %v1237
          %v1386 = vunpack.c.l.b16 %v1238
          %v1387 = vunpack.c.l.b16 %v1239
          %v1388 = vunpack.c.l.b16 %v1240
          %v1389 = vunpack.c.l.b16 %v1241
          %v1390 = vunpack.c.l.b16 %v1242
          %v1391 = vunpack.c.l.b16 %v1243
          %v1392 = vunpack.c.l.b16 %v1244
          %v1393 = vunpack.c.l.b16 %v1245
          %v1394 = vunpack.c.l.b16 %v1246
          %v1395 = vunpack.c.l.b16 %v1247
          %v1396 = vunpack.c.l.b16 %v1248
          %v1397 = vunpack.c.l.b16 %v1249
          %v1398 = vunpack.c.l.b16 %v1250
          %v1399 = vpack.c.b16 %v1368, %v1367
          %v1400 = vpack.c.b16 %v1370, %v1369
          %v1401 = vpack.c.b16 %v1372, %v1371
          %v1402 = vpack.c.b16 %v1374, %v1373
          %v1403 = vpack.c.b16 %v1376, %v1375
          %v1404 = vpack.c.b16 %v1378, %v1377
          %v1405 = vpack.c.b16 %v1380, %v1379
          %v1406 = vpack.c.b16 %v1382, %v1381
          %v1407 = vpack.c.b16 %v1384, %v1383
          %v1408 = vpack.c.b16 %v1386, %v1385
          %v1409 = vpack.c.b16 %v1388, %v1387
          %v1410 = vpack.c.b16 %v1390, %v1389
          %v1411 = vpack.c.b16 %v1392, %v1391
          %v1412 = vpack.c.b16 %v1394, %v1393
          %v1413 = vpack.c.b16 %v1396, %v1395
          %v1414 = vpack.c.b16 %v1398, %v1397
          %1431 = vmatpush.bf16.msra.mxu0 %v1406
          %1432 = vmatpush.bf16.msra.mxu0 %v1405
          %1433 = vmatpush.bf16.msra.mxu0 %v1404
          %1434 = vmatpush.bf16.msra.mxu0 %v1403
          %1435 = vmatpush.bf16.msra.mxu0 %v1402
          %1436 = vmatpush.bf16.msra.mxu0 %v1401
          %1437 = vmatpush.bf16.msra.mxu0 %v1400
          %1438 = vmatpush.bf16.msra.mxu0 %v1399
          %1439 = vmatmul.bf16.gmra.mxu0 %v1303
          %v1440 = vpop.f32.mrf.mxu0
          %v1441 = vadd.f32 %v1253, %v1440
          %v1442 = vpop.f32.mrf.mxu0
          %v1443 = vadd.f32 %v1253, %v1442
          %1444 = vmatmul.bf16.gmra.mxu0 %v1305
          %v1445 = vpop.f32.mrf.mxu0
          %v1446 = vadd.f32 %v1253, %v1445
          %v1447 = vpop.f32.mrf.mxu0
          %v1448 = vadd.f32 %v1253, %v1447
          %1449 = vmatmul.bf16.gmra.mxu0 %v1307
          %v1450 = vpop.f32.mrf.mxu0
          %v1451 = vadd.f32 %v1253, %v1450
          %v1452 = vpop.f32.mrf.mxu0
          %v1453 = vadd.f32 %v1253, %v1452
          %1454 = vmatmul.bf16.gmra.mxu0 %v1309
          %v1455 = vpop.f32.mrf.mxu0
          %v1456 = vadd.f32 %v1253, %v1455
          %v1457 = vpop.f32.mrf.mxu0
          %v1458 = vadd.f32 %v1253, %v1457
          %1459 = vmatmul.bf16.gmra.mxu0 %v1311
          %v1460 = vpop.f32.mrf.mxu0
          %v1461 = vadd.f32 %v1253, %v1460
          %v1462 = vpop.f32.mrf.mxu0
          %v1463 = vadd.f32 %v1253, %v1462
          %1464 = vmatmul.bf16.gmra.mxu0 %v1313
          %v1465 = vpop.f32.mrf.mxu0
          %v1466 = vadd.f32 %v1253, %v1465
          %v1467 = vpop.f32.mrf.mxu0
          %v1468 = vadd.f32 %v1253, %v1467
          %1469 = vmatmul.bf16.gmra.mxu0 %v1315
          %v1470 = vpop.f32.mrf.mxu0
          %v1471 = vadd.f32 %v1253, %v1470
          %v1472 = vpop.f32.mrf.mxu0
          %v1473 = vadd.f32 %v1253, %v1472
          %1474 = vmatmul.bf16.gmra.mxu0 %v1317
          %v1475 = vpop.f32.mrf.mxu0
          %v1476 = vadd.f32 %v1253, %v1475
          %v1477 = vpop.f32.mrf.mxu0
          %v1478 = vadd.f32 %v1253, %v1477
          %1479 = vdwg.mxu0
          %1480 = vmatpush.bf16.msra.mxu0 %v1414
          %1481 = vmatpush.bf16.msra.mxu0 %v1413
          %1482 = vmatpush.bf16.msra.mxu0 %v1412
          %1483 = vmatpush.bf16.msra.mxu0 %v1411
          %1484 = vmatpush.bf16.msra.mxu0 %v1410
          %1485 = vmatpush.bf16.msra.mxu0 %v1409
          %1486 = vmatpush.bf16.msra.mxu0 %v1408
          %1487 = vmatpush.bf16.msra.mxu0 %v1407
          %1488 = vmatmul.bf16.gmra.mxu0 %v1304
          %v1489 = vpop.f32.mrf.mxu0
          %v1490 = vadd.f32 %v1441, %v1489
          %v1491 = vpop.f32.mrf.mxu0
          %v1492 = vadd.f32 %v1443, %v1491
          %1493 = vmatmul.bf16.gmra.mxu0 %v1306
          %v1494 = vpop.f32.mrf.mxu0
          %v1495 = vadd.f32 %v1446, %v1494
          %v1496 = vpop.f32.mrf.mxu0
          %v1497 = vadd.f32 %v1448, %v1496
          %1498 = vmatmul.bf16.gmra.mxu0 %v1308
          %v1499 = vpop.f32.mrf.mxu0
          %v1500 = vadd.f32 %v1451, %v1499
          %v1501 = vpop.f32.mrf.mxu0
          %v1502 = vadd.f32 %v1453, %v1501
          %1503 = vmatmul.bf16.gmra.mxu0 %v1310
          %v1504 = vpop.f32.mrf.mxu0
          %v1505 = vadd.f32 %v1456, %v1504
          %v1506 = vpop.f32.mrf.mxu0
          %v1507 = vadd.f32 %v1458, %v1506
          %1508 = vmatmul.bf16.gmra.mxu0 %v1312
          %v1509 = vpop.f32.mrf.mxu0
          %v1510 = vadd.f32 %v1461, %v1509
          %v1511 = vpop.f32.mrf.mxu0
          %v1512 = vadd.f32 %v1463, %v1511
          %1513 = vmatmul.bf16.gmra.mxu0 %v1314
          %v1514 = vpop.f32.mrf.mxu0
          %v1515 = vadd.f32 %v1466, %v1514
          %v1516 = vpop.f32.mrf.mxu0
          %v1517 = vadd.f32 %v1468, %v1516
          %1518 = vmatmul.bf16.gmra.mxu0 %v1316
          %v1519 = vpop.f32.mrf.mxu0
          %v1520 = vadd.f32 %v1471, %v1519
          %v1521 = vpop.f32.mrf.mxu0
          %v1522 = vadd.f32 %v1473, %v1521
          %1523 = vmatmul.bf16.gmra.mxu0 %v1318
          %v1524 = vpop.f32.mrf.mxu0
          %v1525 = vadd.f32 %v1476, %v1524
          %v1526 = vpop.f32.mrf.mxu0
          %v1527 = vadd.f32 %v1478, %v1526
          %1528 = vdwg.mxu0
          %v1529 = vlaneseq
          %v1530 = vand.u32 %v1529, 127
          %vm1531 = vcmp.lt.s32.totalorder %v1530, 8
          %v1532 = vsel %vm1531, %v1490, -1e+30
          %v1533 = vsel %vm1531, %v1492, -1e+30
          %v1534 = vsel %vm1531, %v1495, -1e+30
          %v1535 = vsel %vm1531, %v1497, -1e+30
          %v1536 = vsel %vm1531, %v1500, -1e+30
          %v1537 = vsel %vm1531, %v1502, -1e+30
          %v1538 = vsel %vm1531, %v1505, -1e+30
          %v1539 = vsel %vm1531, %v1507, -1e+30
          %v1540 = vsel %vm1531, %v1510, -1e+30
          %v1541 = vsel %vm1531, %v1512, -1e+30
          %v1542 = vsel %vm1531, %v1515, -1e+30
          %v1543 = vsel %vm1531, %v1517, -1e+30
          %v1544 = vsel %vm1531, %v1520, -1e+30
          %v1545 = vsel %vm1531, %v1522, -1e+30
          %v1546 = vsel %vm1531, %v1525, -1e+30
          %v1547 = vsel %vm1531, %v1527, -1e+30
          %1548 = vmax.xlane.f32.xlu0 %v1532
          %v1549 = vpop.xlane.xlu0 %1548
          %1550 = vmax.xlane.f32.xlu0 %v1533
          %v1551 = vpop.xlane.xlu0 %1550
          %1552 = vmax.xlane.f32.xlu0 %v1534
          %v1553 = vpop.xlane.xlu0 %1552
          %1554 = vmax.xlane.f32.xlu0 %v1535
          %v1555 = vpop.xlane.xlu0 %1554
          %1556 = vmax.xlane.f32.xlu0 %v1536
          %v1557 = vpop.xlane.xlu0 %1556
          %1558 = vmax.xlane.f32.xlu0 %v1537
          %v1559 = vpop.xlane.xlu0 %1558
          %1560 = vmax.xlane.f32.xlu0 %v1538
          %v1561 = vpop.xlane.xlu0 %1560
          %1562 = vmax.xlane.f32.xlu0 %v1539
          %v1563 = vpop.xlane.xlu0 %1562
          %1564 = vmax.xlane.f32.xlu0 %v1540
          %v1565 = vpop.xlane.xlu0 %1564
          %1566 = vmax.xlane.f32.xlu0 %v1541
          %v1567 = vpop.xlane.xlu0 %1566
          %1568 = vmax.xlane.f32.xlu0 %v1542
          %v1569 = vpop.xlane.xlu0 %1568
          %1570 = vmax.xlane.f32.xlu0 %v1543
          %v1571 = vpop.xlane.xlu0 %1570
          %1572 = vmax.xlane.f32.xlu0 %v1544
          %v1573 = vpop.xlane.xlu0 %1572
          %1574 = vmax.xlane.f32.xlu0 %v1545
          %v1575 = vpop.xlane.xlu0 %1574
          %1576 = vmax.xlane.f32.xlu0 %v1546
          %v1577 = vpop.xlane.xlu0 %1576
          %1578 = vmax.xlane.f32.xlu0 %v1547
          %v1579 = vpop.xlane.xlu0 %1578
          %v1580 = vsub.f32 %v1532, %v1549
          %v1581 = vsub.f32 %v1533, %v1551
          %v1582 = vsub.f32 %v1534, %v1553
          %v1583 = vsub.f32 %v1535, %v1555
          %v1584 = vsub.f32 %v1536, %v1557
          %v1585 = vsub.f32 %v1537, %v1559
          %v1586 = vsub.f32 %v1538, %v1561
          %v1587 = vsub.f32 %v1539, %v1563
          %v1588 = vsub.f32 %v1540, %v1565
          %v1589 = vsub.f32 %v1541, %v1567
          %v1590 = vsub.f32 %v1542, %v1569
          %v1591 = vsub.f32 %v1543, %v1571
          %v1592 = vsub.f32 %v1544, %v1573
          %v1593 = vsub.f32 %v1545, %v1575
          %v1594 = vsub.f32 %v1546, %v1577
          %v1595 = vsub.f32 %v1547, %v1579
          %v1596 = vmul.f32 %v1580, 1.442695
          %v1597 = vpow.pop %v1596
          %v1598 = vmul.f32 %v1581, 1.442695
          %v1599 = vpow.pop %v1598
          %v1600 = vmul.f32 %v1582, 1.442695
          %v1601 = vpow.pop %v1600
          %v1602 = vmul.f32 %v1583, 1.442695
          %v1603 = vpow.pop %v1602
          %v1604 = vmul.f32 %v1584, 1.442695
          %v1605 = vpow.pop %v1604
          %v1606 = vmul.f32 %v1585, 1.442695
          %v1607 = vpow.pop %v1606
          %v1608 = vmul.f32 %v1586, 1.442695
          %v1609 = vpow.pop %v1608
          %v1610 = vmul.f32 %v1587, 1.442695
          %v1611 = vpow.pop %v1610
          %v1612 = vmul.f32 %v1588, 1.442695
          %v1613 = vpow.pop %v1612
          %v1614 = vmul.f32 %v1589, 1.442695
          %v1615 = vpow.pop %v1614
          %v1616 = vmul.f32 %v1590, 1.442695
          %v1617 = vpow.pop %v1616
          %v1618 = vmul.f32 %v1591, 1.442695
          %v1619 = vpow.pop %v1618
          %v1620 = vmul.f32 %v1592, 1.442695
          %v1621 = vpow.pop %v1620
          %v1622 = vmul.f32 %v1593, 1.442695
          %v1623 = vpow.pop %v1622
          %v1624 = vmul.f32 %v1594, 1.442695
          %v1625 = vpow.pop %v1624
          %v1626 = vmul.f32 %v1595, 1.442695
          %v1627 = vpow.pop %v1626
          %1628 = vadd.xlane.f32.xlu0 %v1597
          %v1629 = vpop.xlane.xlu0 %1628
          %1630 = vadd.xlane.f32.xlu0 %v1599
          %v1631 = vpop.xlane.xlu0 %1630
          %1632 = vadd.xlane.f32.xlu0 %v1601
          %v1633 = vpop.xlane.xlu0 %1632
          %1634 = vadd.xlane.f32.xlu0 %v1603
          %v1635 = vpop.xlane.xlu0 %1634
          %1636 = vadd.xlane.f32.xlu0 %v1605
          %v1637 = vpop.xlane.xlu0 %1636
          %1638 = vadd.xlane.f32.xlu0 %v1607
          %v1639 = vpop.xlane.xlu0 %1638
          %1640 = vadd.xlane.f32.xlu0 %v1609
          %v1641 = vpop.xlane.xlu0 %1640
          %1642 = vadd.xlane.f32.xlu0 %v1611
          %v1643 = vpop.xlane.xlu0 %1642
          %1644 = vadd.xlane.f32.xlu0 %v1613
          %v1645 = vpop.xlane.xlu0 %1644
          %1646 = vadd.xlane.f32.xlu0 %v1615
          %v1647 = vpop.xlane.xlu0 %1646
          %1648 = vadd.xlane.f32.xlu0 %v1617
          %v1649 = vpop.xlane.xlu0 %1648
          %1650 = vadd.xlane.f32.xlu0 %v1619
          %v1651 = vpop.xlane.xlu0 %1650
          %1652 = vadd.xlane.f32.xlu0 %v1621
          %v1653 = vpop.xlane.xlu0 %1652
          %1654 = vadd.xlane.f32.xlu0 %v1623
          %v1655 = vpop.xlane.xlu0 %1654
          %1656 = vadd.xlane.f32.xlu0 %v1625
          %v1657 = vpop.xlane.xlu0 %1656
          %1658 = vadd.xlane.f32.xlu0 %v1627
          %v1659 = vpop.xlane.xlu0 %1658
          %v1660 = vlog2.pop %v1629
          %v1661 = vmul.f32 %v1660, 0.6931472
          %v1662 = vlog2.pop %v1631
          %v1663 = vmul.f32 %v1662, 0.6931472
          %v1664 = vlog2.pop %v1633
          %v1665 = vmul.f32 %v1664, 0.6931472
          %v1666 = vlog2.pop %v1635
          %v1667 = vmul.f32 %v1666, 0.6931472
          %v1668 = vlog2.pop %v1637
          %v1669 = vmul.f32 %v1668, 0.6931472
          %v1670 = vlog2.pop %v1639
          %v1671 = vmul.f32 %v1670, 0.6931472
          %v1672 = vlog2.pop %v1641
          %v1673 = vmul.f32 %v1672, 0.6931472
          %v1674 = vlog2.pop %v1643
          %v1675 = vmul.f32 %v1674, 0.6931472
          %v1676 = vlog2.pop %v1645
          %v1677 = vmul.f32 %v1676, 0.6931472
          %v1678 = vlog2.pop %v1647
          %v1679 = vmul.f32 %v1678, 0.6931472
          %v1680 = vlog2.pop %v1649
          %v1681 = vmul.f32 %v1680, 0.6931472
          %v1682 = vlog2.pop %v1651
          %v1683 = vmul.f32 %v1682, 0.6931472
          %v1684 = vlog2.pop %v1653
          %v1685 = vmul.f32 %v1684, 0.6931472
          %v1686 = vlog2.pop %v1655
          %v1687 = vmul.f32 %v1686, 0.6931472
          %v1688 = vlog2.pop %v1657
          %v1689 = vmul.f32 %v1688, 0.6931472
          %v1690 = vlog2.pop %v1659
          %v1691 = vmul.f32 %v1690, 0.6931472
          %v1692 = vsub.f32 %v1580, %v1661
          %v1693 = vsub.f32 %v1581, %v1663
          %v1694 = vsub.f32 %v1582, %v1665
          %v1695 = vsub.f32 %v1583, %v1667
          %v1696 = vsub.f32 %v1584, %v1669
          %v1697 = vsub.f32 %v1585, %v1671
          %v1698 = vsub.f32 %v1586, %v1673
          %v1699 = vsub.f32 %v1587, %v1675
          %v1700 = vsub.f32 %v1588, %v1677
          %v1701 = vsub.f32 %v1589, %v1679
          %v1702 = vsub.f32 %v1590, %v1681
          %v1703 = vsub.f32 %v1591, %v1683
          %v1704 = vsub.f32 %v1592, %v1685
          %v1705 = vsub.f32 %v1593, %v1687
          %v1706 = vsub.f32 %v1594, %v1689
          %v1707 = vsub.f32 %v1595, %v1691
          %1708 = vst [vmem:[%s293] sm:$0xff] %v1692
          %1709 = vst [vmem:[%s293 + $0x8] sm:$0xff] %v1693
          %1710 = vst [vmem:[%s293 + $0x10] sm:$0xff] %v1694
          %1711 = vst [vmem:[%s293 + $0x18] sm:$0xff] %v1695
          %1712 = vst [vmem:[%s293 + $0x20] sm:$0xff] %v1696
          %1713 = vst [vmem:[%s293 + $0x28] sm:$0xff] %v1697
          %1714 = vst [vmem:[%s293 + $0x30] sm:$0xff] %v1698
          %1715 = vst [vmem:[%s293 + $0x38] sm:$0xff] %v1699
          %1716 = vst [vmem:[%s293 + $0x40] sm:$0xff] %v1700
          %1717 = vst [vmem:[%s293 + $0x48] sm:$0xff] %v1701
          %1718 = vst [vmem:[%s293 + $0x50] sm:$0xff] %v1702
          %1719 = vst [vmem:[%s293 + $0x58] sm:$0xff] %v1703
          %1720 = vst [vmem:[%s293 + $0x60] sm:$0xff] %v1704
          %1721 = vst [vmem:[%s293 + $0x68] sm:$0xff] %v1705
          %1722 = vst [vmem:[%s293 + $0x70] sm:$0xff] %v1706
          %1723 = vst [vmem:[%s293 + $0x78] sm:$0xff] %v1707
        $region68: #{tpu_custom_call.1} parent=43 // pred_fallthru
          _
        %s1724 = sand.u32 %s175, 1
        %s1725 = scalar_lea.sflag [#allocation7], %s1724
        %s1726 = sand.u32 %s175, 1
        %s1727 = smul.addr %s1726, 128
        %s1728 = scalar_lea.vmem [#allocation10], %s1727
        // Predicated region
        $region69: #{tpu_custom_call.1} parent=43 // pred_check
          %p1729 = pneg %p185
        $region70: #{tpu_custom_call.1} parent=43 // pred_check_branch
          %1731 = sbr.rel (%p1729) target = $region72
        $region71: #{tpu_custom_call.1} parent=43 // pred_region
          %s1732 = smul.u32 %s26, %s27
          %s1733 = smul.u32 16, %s1732
          %1735 = vsyncadd %s1725, 0
          %s1736 = smul.addr %s1733, 8
          %s1737 = scalar_lea.hbm %s6, %s1736
          %s1738 = sshll.u32 %s1728, 4
          %s1739 = int_to_ptr.vmem [resolvable:$true] %s1738
          %s1740 = sshll.u32 %s1737, 4
          %s1741 = int_to_ptr.hbm [resolvable:$true] %s1740
          %1746 = dma.vmem_to_hbm [thread:$0]  %s1739, 2048, %s1741, %s1725, 128, 128, 8
        $region72: #{tpu_custom_call.1} parent=43 // pred_fallthru
          _
      $region44: #{tpu_custom_call.1} parent=5 // pred_fallthru
        _
      %p1747 = scmp.le.s32.totalorder 2, %s17
      // Predicated region
      $region73: #{tpu_custom_call.1} parent=5 // pred_check
        %p1748 = pneg %p1747
      $region74: #{tpu_custom_call.1} parent=5 // pred_check_branch
        %1750 = sbr.rel (%p1748) target = $region76
      $region75: #{tpu_custom_call.1} parent=5 // pred_region
        %s1751 = ssub.s32 %s17, 2
        // Predicated region
        $region77: #{tpu_custom_call.1} parent=75 // pred_check
          %p1752 = pneg %p191
        $region78: #{tpu_custom_call.1} parent=75 // pred_check_branch
          %1754 = sbr.rel (%p1752) target = $region80
        $region79: #{tpu_custom_call.1} parent=75 // pred_region
          %s1755 = sand.u32 %s176, 1
          %s1756 = scalar_lea.sflag [#allocation7], %s1755
          %s1757 = sand.u32 %s176, 1
          %s1758 = smul.addr %s1757, 128
          %s1759 = scalar_lea.vmem [#allocation10], %s1758
          %1761 = dma.done %s1756, 2048
        $region80: #{tpu_custom_call.1} parent=75 // pred_fallthru
          _
      $region76: #{tpu_custom_call.1} parent=5 // pred_fallthru
        _
    $region6: #{tpu_custom_call.1} parent=1 // loop_footer
      %s21 = sadd.s32 1, %s17
    $region7: #{tpu_custom_call.1} parent=1 // loop_footer_branch
      %16 = sbr.rel target = $region3
    $region8: #{tpu_custom_call.1} parent=1 // loop_exit
      _
    %1762 = vsyncpa [#allocation6], 1
    %s1763 = scalar_lea.sflag [#allocation6], 1
    %1764 = vsyncpa %s1763, 1
    %1765 = vsyncpa [#allocation9], 1
    %1766 = vsyncpa [#allocation7], 1
    %s1767 = scalar_lea.sflag [#allocation7], 1
    %1768 = vsyncpa %s1767, 1

</llo_original>
